<compile_context>
chip_gen: v7x
topology: tpu7x:2x2x1
jax: 0.10.0
libtpu: 0.0.40
codegen_flags: <defaults>
</compile_context>

<pallas_src>
import functools

import jax
import jax.numpy as jnp
from jax.experimental import pallas as pl
from jax.experimental.pallas import tpu as pltpu

NUM_CLASSES = 10


# -----------------------------------------------------------------------------
# Fused Pallas kernel: conv1 -> relu -> conv2 -> relu -> maxpool -> fc1 -> relu
#                      -> fc2 -> log_softmax
# -----------------------------------------------------------------------------
def _fused_cnn_kernel(x_ref, w1_ref, b1_ref, w2_ref, b2_ref,
                      wf1_ref, bf1_ref, wf2_ref, bf2_ref, o_ref,
                      *, batch, height, width):
    B, H, W = batch, height, width
    H1, W1 = H - 2, W - 2          # conv1 output spatial (4x4 for 6x6 input)
    H2, W2 = H - 4, W - 4          # conv2 output spatial (2x2 for 6x6 input)
    C0, C1, C2 = 3, 32, 128

    x = x_ref[...]                 # (B*H*W, C0)   rows ordered (b, ii, jj)
    w1 = w1_ref[...]               # (9*C0, C1)    rows ordered (kh, kw, cin)
    w2 = w2_ref[...]               # (9*C1, C2)    rows ordered (kh, kw, cin)

    # ---- conv1 (3->32, 3x3, valid) + ReLU: in-kernel im2col via tap accumulation.
    # h1 rows ordered (b, i, j): row = b*H1*W1 + i*W1 + j.  K=3 per tap, so the
    # contraction is done as VPU broadcast-FMAs (no awkward tiny-K MXU passes).
    acc1 = jnp.zeros((B * H1 * W1, C1), jnp.float32)
    for di in range(3):
        for dj in range(3):
            # For output (b, i, j) the tap needs input row b*H*W + (i+di)*W + (j+dj);
            # for fixed (b, i) that is W1 contiguous rows starting at
            # b*H*W + (i+di)*W + dj.
            pieces = []
            for b in range(B):
                for i in range(H1):
                    s = b * H * W + (i + di) * W + dj
                    pieces.append(x[s:s + W1, :])                 # (W1, C0)
            blk = jnp.concatenate(pieces, axis=0)                 # (B*H1*W1, C0)
            t = di * 3 + dj
            for cin in range(C0):
                acc1 = acc1 + blk[:, cin:cin + 1] * w1[t * C0 + cin:t * C0 + cin + 1, :]
    h1 = jnp.maximum(acc1 + b1_ref[...], 0.0)                     # (B*H1*W1, C1)

    # ---- conv2 (32->128, 3x3, valid) + ReLU: tap accumulation on the MXU.
    acc2 = jnp.zeros((B * H2 * W2, C2), jnp.float32)
    for di in range(3):
        for dj in range(3):
            pieces = []
            for b in range(B):
                for oi in range(H2):
                    s = b * H1 * W1 + (oi + di) * W1 + dj
                    pieces.append(h1[s:s + W2, :])                # (W2, C1)
            blk = jnp.concatenate(pieces, axis=0)                 # (B*H2*W2, C1)
            t = di * 3 + dj
            acc2 = acc2 + jnp.dot(blk, w2[t * C1:(t + 1) * C1, :],
                                  preferred_element_type=jnp.float32)
    h2 = jnp.maximum(acc2 + b2_ref[...], 0.0)                     # (B*H2*W2, C2)

    # ---- max_pool2d(2): with a 2x2 map the single window covers everything,
    # so pooling is a per-image elementwise max over the H2*W2 rows.
    rows_per_image = H2 * W2
    pooled_rows = []
    for b in range(B):
        base = b * rows_per_image
        m = h2[base:base + 1, :]
        for r in range(1, rows_per_image):
            m = jnp.maximum(m, h2[base + r:base + r + 1, :])
        pooled_rows.append(m)
    pooled = jnp.concatenate(pooled_rows, axis=0)                 # (B, C2)

    # ---- dropout1 / AvgPool2d(1,1) / dropout2 are identity at inference.
    # ---- fc1 + relu, fc2, log_softmax.
    z = jnp.dot(pooled, wf1_ref[...], preferred_element_type=jnp.float32) + bf1_ref[...]
    z = jnp.maximum(z, 0.0)
    z = jnp.dot(z, wf2_ref[...], preferred_element_type=jnp.float32) + bf2_ref[...]
    zmax = jnp.max(z, axis=-1, keepdims=True)
    lse = zmax + jnp.log(jnp.sum(jnp.exp(z - zmax), axis=-1, keepdims=True))
    o_ref[...] = (z - lse).astype(o_ref.dtype)


# -----------------------------------------------------------------------------
# Jitted wrapper: the only ops outside the kernel are the NCHW->NHWC transpose
# and bias reshapes, all fused by XLA into the same dispatch.
# -----------------------------------------------------------------------------
@jax.jit
def cnn_forward(x_nchw, params):
    """x_nchw: (B, 3, 6, 6) float32 NCHW (PyTorch layout)."""
    B, C, H, W = x_nchw.shape
    assert C == 3 and H - 4 == 2 and W - 4 == 2, "fc1(128) implies (B, 3, 6, 6) input"
    x = jnp.transpose(x_nchw, (0, 2, 3, 1)).reshape(B * H * W, C)  # rows (b, ii, jj)

    vmem = pl.BlockSpec(memory_space=pltpu.MemorySpace.VMEM)
    kernel = functools.partial(_fused_cnn_kernel, batch=B, height=H, width=W)
    return pl.pallas_call(
        kernel,
        out_shape=jax.ShapeDtypeStruct((B, NUM_CLASSES), jnp.float32),
        in_specs=[vmem] * 9,
        out_specs=vmem,
    )(x,
      params["w1"], params["b1"].reshape(1, -1),
      params["w2"], params["b2"].reshape(1, -1),
      params["w_fc1"], params["b_fc1"].reshape(1, -1),
      params["w_fc2"], params["b_fc2"].reshape(1, -1))


# -----------------------------------------------------------------------------
# Pure-JAX reference (for the correctness check)
# -----------------------------------------------------------------------------
def ref_forward(x_nchw, params):
    w1 = params["w1"].reshape(3, 3, 3, 32)      # HWIO
    w2 = params["w2"].reshape(3, 3, 32, 128)    # HWIO
    dn = ("NCHW", "HWIO", "NCHW")
    x = jax.lax.conv_general_dilated(x_nchw, w1, (1, 1), "VALID", dimension_numbers=dn)
    x = jax.nn.relu(x + params["b1"][None, :, None, None])
    x = jax.lax.conv_general_dilated(x, w2, (1, 1), "VALID", dimension_numbers=dn)
    x = jax.nn.relu(x + params["b2"][None, :, None, None])
    B = x.shape[0]
    x = jnp.max(x.reshape(B, 128, -1), axis=-1)                    # maxpool(2) over 2x2
    x = jax.nn.relu(x @ params["w_fc1"] + params["b_fc1"])
    x = x @ params["w_fc2"] + params["b_fc2"]
    return jax.nn.log_softmax(x, axis=1)


# -----------------------------------------------------------------------------
# Deterministic parameter init + run
# -----------------------------------------------------------------------------
def init_params(key):
    # NOTE: real PyTorch conv weights are (cout, cin, kh, kw); they must be
    # permuted to (kh, kw, cin, cout) before flattening to match this layout.
    ks = jax.random.split(key, 8)
    s = 0.1
    return {
        # conv weights stored pre-flattened as (kh*kw*cin, cout), order (kh, kw, cin)
        "w1": s * jax.random.normal(ks[0], (3 * 3 * 3, 32), jnp.float32),
        "b1": s * jax.random.normal(ks[1], (32,), jnp.float32),
        "w2": s * jax.random.normal(ks[2], (3 * 3 * 32, 128), jnp.float32),
        "b2": s * jax.random.normal(ks[3], (128,), jnp.float32),
        "w_fc1": s * jax.random.normal(ks[4], (128, 128), jnp.float32),
        "b_fc1": s * jax.random.normal(ks[5], (128,), jnp.float32),
        "w_fc2": s * jax.random.normal(ks[6], (128, NUM_CLASSES), jnp.float32),
        "b_fc2": s * jax.random.normal(ks[7], (NUM_CLASSES,), jnp.float32),
    }


if __name__ == "__main__":
    key = jax.random.PRNGKey(0)
    kx, kp = jax.random.split(key)
    x = jax.random.normal(kx, (2, 3, 6, 6), jnp.float32)   # NCHW, batch=2
    params = init_params(kp)

    out = jax.block_until_ready(cnn_forward(x, params))
    ref = jax.block_until_ready(ref_forward(x, params))

    assert out.shape == (2, NUM_CLASSES)
    assert jnp.allclose(out, ref, atol=1e-4, rtol=1e-4), (out, ref)
    print("KERNEL_OK")
</pallas_src>

<mosaic_0001>
module attributes {stable_mosaic.version = 11 : i64} {
  func.func @_fused_cnn_kernel(%arg0: memref<72x3xf32, #tpu.memory_space<vmem>>, %arg1: memref<27x32xf32, #tpu.memory_space<vmem>>, %arg2: memref<1x32xf32, #tpu.memory_space<vmem>>, %arg3: memref<288x128xf32, #tpu.memory_space<vmem>>, %arg4: memref<1x128xf32, #tpu.memory_space<vmem>>, %arg5: memref<128x128xf32, #tpu.memory_space<vmem>>, %arg6: memref<1x128xf32, #tpu.memory_space<vmem>>, %arg7: memref<128x10xf32, #tpu.memory_space<vmem>>, %arg8: memref<1x10xf32, #tpu.memory_space<vmem>>, %arg9: memref<2x10xf32, #tpu.memory_space<vmem>>) attributes {dimension_semantics = [], scalar_prefetch = 0 : i64, scratch_operands = 0 : i64, tpu.core_type = #tpu.core_type<tc>} {
    %c0 = arith.constant 0 : index
    %c0_0 = arith.constant 0 : index
    %0 = vector.load %arg0[%c0, %c0_0] : memref<72x3xf32, #tpu.memory_space<vmem>>, vector<72x3xf32>
    %c0_1 = arith.constant 0 : index
    %c0_2 = arith.constant 0 : index
    %1 = vector.load %arg1[%c0_1, %c0_2] : memref<27x32xf32, #tpu.memory_space<vmem>>, vector<27x32xf32>
    %c0_3 = arith.constant 0 : index
    %c0_4 = arith.constant 0 : index
    %2 = vector.load %arg3[%c0_3, %c0_4] : memref<288x128xf32, #tpu.memory_space<vmem>>, vector<288x128xf32>
    %cst = arith.constant 0.000000e+00 : f32
    %3 = vector.broadcast %cst : f32 to vector<32x32xf32>
    %4 = vector.extract_strided_slice %0 {offsets = [0, 0], sizes = [4, 3], strides = [1, 1]} : vector<72x3xf32> to vector<4x3xf32>
    %5 = vector.extract_strided_slice %0 {offsets = [6, 0], sizes = [4, 3], strides = [1, 1]} : vector<72x3xf32> to vector<4x3xf32>
    %6 = vector.extract_strided_slice %0 {offsets = [12, 0], sizes = [4, 3], strides = [1, 1]} : vector<72x3xf32> to vector<4x3xf32>
    %7 = vector.extract_strided_slice %0 {offsets = [18, 0], sizes = [4, 3], strides = [1, 1]} : vector<72x3xf32> to vector<4x3xf32>
    %8 = vector.extract_strided_slice %0 {offsets = [36, 0], sizes = [4, 3], strides = [1, 1]} : vector<72x3xf32> to vector<4x3xf32>
    %9 = vector.extract_strided_slice %0 {offsets = [42, 0], sizes = [4, 3], strides = [1, 1]} : vector<72x3xf32> to vector<4x3xf32>
    %10 = vector.extract_strided_slice %0 {offsets = [48, 0], sizes = [4, 3], strides = [1, 1]} : vector<72x3xf32> to vector<4x3xf32>
    %11 = vector.extract_strided_slice %0 {offsets = [54, 0], sizes = [4, 3], strides = [1, 1]} : vector<72x3xf32> to vector<4x3xf32>
    %12 = tpu.concatenate %4, %5, %6, %7, %8, %9, %10, %11 in 0 : vector<4x3xf32>, vector<4x3xf32>, vector<4x3xf32>, vector<4x3xf32>, vector<4x3xf32>, vector<4x3xf32>, vector<4x3xf32>, vector<4x3xf32> -> vector<32x3xf32>
    %13 = vector.extract_strided_slice %12 {offsets = [0, 0], sizes = [32, 1], strides = [1, 1]} : vector<32x3xf32> to vector<32x1xf32>
    %14 = vector.extract_strided_slice %1 {offsets = [0, 0], sizes = [1, 32], strides = [1, 1]} : vector<27x32xf32> to vector<1x32xf32>
    %15 = vector.broadcast %13 : vector<32x1xf32> to vector<32x32xf32>
    %16 = vector.broadcast %14 : vector<1x32xf32> to vector<32x32xf32>
    %17 = arith.mulf %15, %16 : vector<32x32xf32>
    %18 = arith.addf %3, %17 : vector<32x32xf32>
    %19 = vector.extract_strided_slice %12 {offsets = [0, 1], sizes = [32, 1], strides = [1, 1]} : vector<32x3xf32> to vector<32x1xf32>
    %20 = vector.extract_strided_slice %1 {offsets = [1, 0], sizes = [1, 32], strides = [1, 1]} : vector<27x32xf32> to vector<1x32xf32>
    %21 = vector.broadcast %19 : vector<32x1xf32> to vector<32x32xf32>
    %22 = vector.broadcast %20 : vector<1x32xf32> to vector<32x32xf32>
    %23 = arith.mulf %21, %22 : vector<32x32xf32>
    %24 = arith.addf %18, %23 : vector<32x32xf32>
    %25 = vector.extract_strided_slice %12 {offsets = [0, 2], sizes = [32, 1], strides = [1, 1]} : vector<32x3xf32> to vector<32x1xf32>
    %26 = vector.extract_strided_slice %1 {offsets = [2, 0], sizes = [1, 32], strides = [1, 1]} : vector<27x32xf32> to vector<1x32xf32>
    %27 = vector.broadcast %25 : vector<32x1xf32> to vector<32x32xf32>
    %28 = vector.broadcast %26 : vector<1x32xf32> to vector<32x32xf32>
    %29 = arith.mulf %27, %28 : vector<32x32xf32>
    %30 = arith.addf %24, %29 : vector<32x32xf32>
    %31 = vector.extract_strided_slice %0 {offsets = [1, 0], sizes = [4, 3], strides = [1, 1]} : vector<72x3xf32> to vector<4x3xf32>
    %32 = vector.extract_strided_slice %0 {offsets = [7, 0], sizes = [4, 3], strides = [1, 1]} : vector<72x3xf32> to vector<4x3xf32>
    %33 = vector.extract_strided_slice %0 {offsets = [13, 0], sizes = [4, 3], strides = [1, 1]} : vector<72x3xf32> to vector<4x3xf32>
    %34 = vector.extract_strided_slice %0 {offsets = [19, 0], sizes = [4, 3], strides = [1, 1]} : vector<72x3xf32> to vector<4x3xf32>
    %35 = vector.extract_strided_slice %0 {offsets = [37, 0], sizes = [4, 3], strides = [1, 1]} : vector<72x3xf32> to vector<4x3xf32>
    %36 = vector.extract_strided_slice %0 {offsets = [43, 0], sizes = [4, 3], strides = [1, 1]} : vector<72x3xf32> to vector<4x3xf32>
    %37 = vector.extract_strided_slice %0 {offsets = [49, 0], sizes = [4, 3], strides = [1, 1]} : vector<72x3xf32> to vector<4x3xf32>
    %38 = vector.extract_strided_slice %0 {offsets = [55, 0], sizes = [4, 3], strides = [1, 1]} : vector<72x3xf32> to vector<4x3xf32>
    %39 = tpu.concatenate %31, %32, %33, %34, %35, %36, %37, %38 in 0 : vector<4x3xf32>, vector<4x3xf32>, vector<4x3xf32>, vector<4x3xf32>, vector<4x3xf32>, vector<4x3xf32>, vector<4x3xf32>, vector<4x3xf32> -> vector<32x3xf32>
    %40 = vector.extract_strided_slice %39 {offsets = [0, 0], sizes = [32, 1], strides = [1, 1]} : vector<32x3xf32> to vector<32x1xf32>
    %41 = vector.extract_strided_slice %1 {offsets = [3, 0], sizes = [1, 32], strides = [1, 1]} : vector<27x32xf32> to vector<1x32xf32>
    %42 = vector.broadcast %40 : vector<32x1xf32> to vector<32x32xf32>
    %43 = vector.broadcast %41 : vector<1x32xf32> to vector<32x32xf32>
    %44 = arith.mulf %42, %43 : vector<32x32xf32>
    %45 = arith.addf %30, %44 : vector<32x32xf32>
    %46 = vector.extract_strided_slice %39 {offsets = [0, 1], sizes = [32, 1], strides = [1, 1]} : vector<32x3xf32> to vector<32x1xf32>
    %47 = vector.extract_strided_slice %1 {offsets = [4, 0], sizes = [1, 32], strides = [1, 1]} : vector<27x32xf32> to vector<1x32xf32>
    %48 = vector.broadcast %46 : vector<32x1xf32> to vector<32x32xf32>
    %49 = vector.broadcast %47 : vector<1x32xf32> to vector<32x32xf32>
    %50 = arith.mulf %48, %49 : vector<32x32xf32>
    %51 = arith.addf %45, %50 : vector<32x32xf32>
    %52 = vector.extract_strided_slice %39 {offsets = [0, 2], sizes = [32, 1], strides = [1, 1]} : vector<32x3xf32> to vector<32x1xf32>
    %53 = vector.extract_strided_slice %1 {offsets = [5, 0], sizes = [1, 32], strides = [1, 1]} : vector<27x32xf32> to vector<1x32xf32>
    %54 = vector.broadcast %52 : vector<32x1xf32> to vector<32x32xf32>
    %55 = vector.broadcast %53 : vector<1x32xf32> to vector<32x32xf32>
    %56 = arith.mulf %54, %55 : vector<32x32xf32>
    %57 = arith.addf %51, %56 : vector<32x32xf32>
    %58 = vector.extract_strided_slice %0 {offsets = [2, 0], sizes = [4, 3], strides = [1, 1]} : vector<72x3xf32> to vector<4x3xf32>
    %59 = vector.extract_strided_slice %0 {offsets = [8, 0], sizes = [4, 3], strides = [1, 1]} : vector<72x3xf32> to vector<4x3xf32>
    %60 = vector.extract_strided_slice %0 {offsets = [14, 0], sizes = [4, 3], strides = [1, 1]} : vector<72x3xf32> to vector<4x3xf32>
    %61 = vector.extract_strided_slice %0 {offsets = [20, 0], sizes = [4, 3], strides = [1, 1]} : vector<72x3xf32> to vector<4x3xf32>
    %62 = vector.extract_strided_slice %0 {offsets = [38, 0], sizes = [4, 3], strides = [1, 1]} : vector<72x3xf32> to vector<4x3xf32>
    %63 = vector.extract_strided_slice %0 {offsets = [44, 0], sizes = [4, 3], strides = [1, 1]} : vector<72x3xf32> to vector<4x3xf32>
    %64 = vector.extract_strided_slice %0 {offsets = [50, 0], sizes = [4, 3], strides = [1, 1]} : vector<72x3xf32> to vector<4x3xf32>
    %65 = vector.extract_strided_slice %0 {offsets = [56, 0], sizes = [4, 3], strides = [1, 1]} : vector<72x3xf32> to vector<4x3xf32>
    %66 = tpu.concatenate %58, %59, %60, %61, %62, %63, %64, %65 in 0 : vector<4x3xf32>, vector<4x3xf32>, vector<4x3xf32>, vector<4x3xf32>, vector<4x3xf32>, vector<4x3xf32>, vector<4x3xf32>, vector<4x3xf32> -> vector<32x3xf32>
    %67 = vector.extract_strided_slice %66 {offsets = [0, 0], sizes = [32, 1], strides = [1, 1]} : vector<32x3xf32> to vector<32x1xf32>
    %68 = vector.extract_strided_slice %1 {offsets = [6, 0], sizes = [1, 32], strides = [1, 1]} : vector<27x32xf32> to vector<1x32xf32>
    %69 = vector.broadcast %67 : vector<32x1xf32> to vector<32x32xf32>
    %70 = vector.broadcast %68 : vector<1x32xf32> to vector<32x32xf32>
    %71 = arith.mulf %69, %70 : vector<32x32xf32>
    %72 = arith.addf %57, %71 : vector<32x32xf32>
    %73 = vector.extract_strided_slice %66 {offsets = [0, 1], sizes = [32, 1], strides = [1, 1]} : vector<32x3xf32> to vector<32x1xf32>
    %74 = vector.extract_strided_slice %1 {offsets = [7, 0], sizes = [1, 32], strides = [1, 1]} : vector<27x32xf32> to vector<1x32xf32>
    %75 = vector.broadcast %73 : vector<32x1xf32> to vector<32x32xf32>
    %76 = vector.broadcast %74 : vector<1x32xf32> to vector<32x32xf32>
    %77 = arith.mulf %75, %76 : vector<32x32xf32>
    %78 = arith.addf %72, %77 : vector<32x32xf32>
    %79 = vector.extract_strided_slice %66 {offsets = [0, 2], sizes = [32, 1], strides = [1, 1]} : vector<32x3xf32> to vector<32x1xf32>
    %80 = vector.extract_strided_slice %1 {offsets = [8, 0], sizes = [1, 32], strides = [1, 1]} : vector<27x32xf32> to vector<1x32xf32>
    %81 = vector.broadcast %79 : vector<32x1xf32> to vector<32x32xf32>
    %82 = vector.broadcast %80 : vector<1x32xf32> to vector<32x32xf32>
    %83 = arith.mulf %81, %82 : vector<32x32xf32>
    %84 = arith.addf %78, %83 : vector<32x32xf32>
    %85 = vector.extract_strided_slice %0 {offsets = [6, 0], sizes = [4, 3], strides = [1, 1]} : vector<72x3xf32> to vector<4x3xf32>
    %86 = vector.extract_strided_slice %0 {offsets = [12, 0], sizes = [4, 3], strides = [1, 1]} : vector<72x3xf32> to vector<4x3xf32>
    %87 = vector.extract_strided_slice %0 {offsets = [18, 0], sizes = [4, 3], strides = [1, 1]} : vector<72x3xf32> to vector<4x3xf32>
    %88 = vector.extract_strided_slice %0 {offsets = [24, 0], sizes = [4, 3], strides = [1, 1]} : vector<72x3xf32> to vector<4x3xf32>
    %89 = vector.extract_strided_slice %0 {offsets = [42, 0], sizes = [4, 3], strides = [1, 1]} : vector<72x3xf32> to vector<4x3xf32>
    %90 = vector.extract_strided_slice %0 {offsets = [48, 0], sizes = [4, 3], strides = [1, 1]} : vector<72x3xf32> to vector<4x3xf32>
    %91 = vector.extract_strided_slice %0 {offsets = [54, 0], sizes = [4, 3], strides = [1, 1]} : vector<72x3xf32> to vector<4x3xf32>
    %92 = vector.extract_strided_slice %0 {offsets = [60, 0], sizes = [4, 3], strides = [1, 1]} : vector<72x3xf32> to vector<4x3xf32>
    %93 = tpu.concatenate %85, %86, %87, %88, %89, %90, %91, %92 in 0 : vector<4x3xf32>, vector<4x3xf32>, vector<4x3xf32>, vector<4x3xf32>, vector<4x3xf32>, vector<4x3xf32>, vector<4x3xf32>, vector<4x3xf32> -> vector<32x3xf32>
    %94 = vector.extract_strided_slice %93 {offsets = [0, 0], sizes = [32, 1], strides = [1, 1]} : vector<32x3xf32> to vector<32x1xf32>
    %95 = vector.extract_strided_slice %1 {offsets = [9, 0], sizes = [1, 32], strides = [1, 1]} : vector<27x32xf32> to vector<1x32xf32>
    %96 = vector.broadcast %94 : vector<32x1xf32> to vector<32x32xf32>
    %97 = vector.broadcast %95 : vector<1x32xf32> to vector<32x32xf32>
    %98 = arith.mulf %96, %97 : vector<32x32xf32>
    %99 = arith.addf %84, %98 : vector<32x32xf32>
    %100 = vector.extract_strided_slice %93 {offsets = [0, 1], sizes = [32, 1], strides = [1, 1]} : vector<32x3xf32> to vector<32x1xf32>
    %101 = vector.extract_strided_slice %1 {offsets = [10, 0], sizes = [1, 32], strides = [1, 1]} : vector<27x32xf32> to vector<1x32xf32>
    %102 = vector.broadcast %100 : vector<32x1xf32> to vector<32x32xf32>
    %103 = vector.broadcast %101 : vector<1x32xf32> to vector<32x32xf32>
    %104 = arith.mulf %102, %103 : vector<32x32xf32>
    %105 = arith.addf %99, %104 : vector<32x32xf32>
    %106 = vector.extract_strided_slice %93 {offsets = [0, 2], sizes = [32, 1], strides = [1, 1]} : vector<32x3xf32> to vector<32x1xf32>
    %107 = vector.extract_strided_slice %1 {offsets = [11, 0], sizes = [1, 32], strides = [1, 1]} : vector<27x32xf32> to vector<1x32xf32>
    %108 = vector.broadcast %106 : vector<32x1xf32> to vector<32x32xf32>
    %109 = vector.broadcast %107 : vector<1x32xf32> to vector<32x32xf32>
    %110 = arith.mulf %108, %109 : vector<32x32xf32>
    %111 = arith.addf %105, %110 : vector<32x32xf32>
    %112 = vector.extract_strided_slice %0 {offsets = [7, 0], sizes = [4, 3], strides = [1, 1]} : vector<72x3xf32> to vector<4x3xf32>
    %113 = vector.extract_strided_slice %0 {offsets = [13, 0], sizes = [4, 3], strides = [1, 1]} : vector<72x3xf32> to vector<4x3xf32>
    %114 = vector.extract_strided_slice %0 {offsets = [19, 0], sizes = [4, 3], strides = [1, 1]} : vector<72x3xf32> to vector<4x3xf32>
    %115 = vector.extract_strided_slice %0 {offsets = [25, 0], sizes = [4, 3], strides = [1, 1]} : vector<72x3xf32> to vector<4x3xf32>
    %116 = vector.extract_strided_slice %0 {offsets = [43, 0], sizes = [4, 3], strides = [1, 1]} : vector<72x3xf32> to vector<4x3xf32>
    %117 = vector.extract_strided_slice %0 {offsets = [49, 0], sizes = [4, 3], strides = [1, 1]} : vector<72x3xf32> to vector<4x3xf32>
    %118 = vector.extract_strided_slice %0 {offsets = [55, 0], sizes = [4, 3], strides = [1, 1]} : vector<72x3xf32> to vector<4x3xf32>
    %119 = vector.extract_strided_slice %0 {offsets = [61, 0], sizes = [4, 3], strides = [1, 1]} : vector<72x3xf32> to vector<4x3xf32>
    %120 = tpu.concatenate %112, %113, %114, %115, %116, %117, %118, %119 in 0 : vector<4x3xf32>, vector<4x3xf32>, vector<4x3xf32>, vector<4x3xf32>, vector<4x3xf32>, vector<4x3xf32>, vector<4x3xf32>, vector<4x3xf32> -> vector<32x3xf32>
    %121 = vector.extract_strided_slice %120 {offsets = [0, 0], sizes = [32, 1], strides = [1, 1]} : vector<32x3xf32> to vector<32x1xf32>
    %122 = vector.extract_strided_slice %1 {offsets = [12, 0], sizes = [1, 32], strides = [1, 1]} : vector<27x32xf32> to vector<1x32xf32>
    %123 = vector.broadcast %121 : vector<32x1xf32> to vector<32x32xf32>
    %124 = vector.broadcast %122 : vector<1x32xf32> to vector<32x32xf32>
    %125 = arith.mulf %123, %124 : vector<32x32xf32>
    %126 = arith.addf %111, %125 : vector<32x32xf32>
    %127 = vector.extract_strided_slice %120 {offsets = [0, 1], sizes = [32, 1], strides = [1, 1]} : vector<32x3xf32> to vector<32x1xf32>
    %128 = vector.extract_strided_slice %1 {offsets = [13, 0], sizes = [1, 32], strides = [1, 1]} : vector<27x32xf32> to vector<1x32xf32>
    %129 = vector.broadcast %127 : vector<32x1xf32> to vector<32x32xf32>
    %130 = vector.broadcast %128 : vector<1x32xf32> to vector<32x32xf32>
    %131 = arith.mulf %129, %130 : vector<32x32xf32>
    %132 = arith.addf %126, %131 : vector<32x32xf32>
    %133 = vector.extract_strided_slice %120 {offsets = [0, 2], sizes = [32, 1], strides = [1, 1]} : vector<32x3xf32> to vector<32x1xf32>
    %134 = vector.extract_strided_slice %1 {offsets = [14, 0], sizes = [1, 32], strides = [1, 1]} : vector<27x32xf32> to vector<1x32xf32>
    %135 = vector.broadcast %133 : vector<32x1xf32> to vector<32x32xf32>
    %136 = vector.broadcast %134 : vector<1x32xf32> to vector<32x32xf32>
    %137 = arith.mulf %135, %136 : vector<32x32xf32>
    %138 = arith.addf %132, %137 : vector<32x32xf32>
    %139 = vector.extract_strided_slice %0 {offsets = [8, 0], sizes = [4, 3], strides = [1, 1]} : vector<72x3xf32> to vector<4x3xf32>
    %140 = vector.extract_strided_slice %0 {offsets = [14, 0], sizes = [4, 3], strides = [1, 1]} : vector<72x3xf32> to vector<4x3xf32>
    %141 = vector.extract_strided_slice %0 {offsets = [20, 0], sizes = [4, 3], strides = [1, 1]} : vector<72x3xf32> to vector<4x3xf32>
    %142 = vector.extract_strided_slice %0 {offsets = [26, 0], sizes = [4, 3], strides = [1, 1]} : vector<72x3xf32> to vector<4x3xf32>
    %143 = vector.extract_strided_slice %0 {offsets = [44, 0], sizes = [4, 3], strides = [1, 1]} : vector<72x3xf32> to vector<4x3xf32>
    %144 = vector.extract_strided_slice %0 {offsets = [50, 0], sizes = [4, 3], strides = [1, 1]} : vector<72x3xf32> to vector<4x3xf32>
    %145 = vector.extract_strided_slice %0 {offsets = [56, 0], sizes = [4, 3], strides = [1, 1]} : vector<72x3xf32> to vector<4x3xf32>
    %146 = vector.extract_strided_slice %0 {offsets = [62, 0], sizes = [4, 3], strides = [1, 1]} : vector<72x3xf32> to vector<4x3xf32>
    %147 = tpu.concatenate %139, %140, %141, %142, %143, %144, %145, %146 in 0 : vector<4x3xf32>, vector<4x3xf32>, vector<4x3xf32>, vector<4x3xf32>, vector<4x3xf32>, vector<4x3xf32>, vector<4x3xf32>, vector<4x3xf32> -> vector<32x3xf32>
    %148 = vector.extract_strided_slice %147 {offsets = [0, 0], sizes = [32, 1], strides = [1, 1]} : vector<32x3xf32> to vector<32x1xf32>
    %149 = vector.extract_strided_slice %1 {offsets = [15, 0], sizes = [1, 32], strides = [1, 1]} : vector<27x32xf32> to vector<1x32xf32>
    %150 = vector.broadcast %148 : vector<32x1xf32> to vector<32x32xf32>
    %151 = vector.broadcast %149 : vector<1x32xf32> to vector<32x32xf32>
    %152 = arith.mulf %150, %151 : vector<32x32xf32>
    %153 = arith.addf %138, %152 : vector<32x32xf32>
    %154 = vector.extract_strided_slice %147 {offsets = [0, 1], sizes = [32, 1], strides = [1, 1]} : vector<32x3xf32> to vector<32x1xf32>
    %155 = vector.extract_strided_slice %1 {offsets = [16, 0], sizes = [1, 32], strides = [1, 1]} : vector<27x32xf32> to vector<1x32xf32>
    %156 = vector.broadcast %154 : vector<32x1xf32> to vector<32x32xf32>
    %157 = vector.broadcast %155 : vector<1x32xf32> to vector<32x32xf32>
    %158 = arith.mulf %156, %157 : vector<32x32xf32>
    %159 = arith.addf %153, %158 : vector<32x32xf32>
    %160 = vector.extract_strided_slice %147 {offsets = [0, 2], sizes = [32, 1], strides = [1, 1]} : vector<32x3xf32> to vector<32x1xf32>
    %161 = vector.extract_strided_slice %1 {offsets = [17, 0], sizes = [1, 32], strides = [1, 1]} : vector<27x32xf32> to vector<1x32xf32>
    %162 = vector.broadcast %160 : vector<32x1xf32> to vector<32x32xf32>
    %163 = vector.broadcast %161 : vector<1x32xf32> to vector<32x32xf32>
    %164 = arith.mulf %162, %163 : vector<32x32xf32>
    %165 = arith.addf %159, %164 : vector<32x32xf32>
    %166 = vector.extract_strided_slice %0 {offsets = [12, 0], sizes = [4, 3], strides = [1, 1]} : vector<72x3xf32> to vector<4x3xf32>
    %167 = vector.extract_strided_slice %0 {offsets = [18, 0], sizes = [4, 3], strides = [1, 1]} : vector<72x3xf32> to vector<4x3xf32>
    %168 = vector.extract_strided_slice %0 {offsets = [24, 0], sizes = [4, 3], strides = [1, 1]} : vector<72x3xf32> to vector<4x3xf32>
    %169 = vector.extract_strided_slice %0 {offsets = [30, 0], sizes = [4, 3], strides = [1, 1]} : vector<72x3xf32> to vector<4x3xf32>
    %170 = vector.extract_strided_slice %0 {offsets = [48, 0], sizes = [4, 3], strides = [1, 1]} : vector<72x3xf32> to vector<4x3xf32>
    %171 = vector.extract_strided_slice %0 {offsets = [54, 0], sizes = [4, 3], strides = [1, 1]} : vector<72x3xf32> to vector<4x3xf32>
    %172 = vector.extract_strided_slice %0 {offsets = [60, 0], sizes = [4, 3], strides = [1, 1]} : vector<72x3xf32> to vector<4x3xf32>
    %173 = vector.extract_strided_slice %0 {offsets = [66, 0], sizes = [4, 3], strides = [1, 1]} : vector<72x3xf32> to vector<4x3xf32>
    %174 = tpu.concatenate %166, %167, %168, %169, %170, %171, %172, %173 in 0 : vector<4x3xf32>, vector<4x3xf32>, vector<4x3xf32>, vector<4x3xf32>, vector<4x3xf32>, vector<4x3xf32>, vector<4x3xf32>, vector<4x3xf32> -> vector<32x3xf32>
    %175 = vector.extract_strided_slice %174 {offsets = [0, 0], sizes = [32, 1], strides = [1, 1]} : vector<32x3xf32> to vector<32x1xf32>
    %176 = vector.extract_strided_slice %1 {offsets = [18, 0], sizes = [1, 32], strides = [1, 1]} : vector<27x32xf32> to vector<1x32xf32>
    %177 = vector.broadcast %175 : vector<32x1xf32> to vector<32x32xf32>
    %178 = vector.broadcast %176 : vector<1x32xf32> to vector<32x32xf32>
    %179 = arith.mulf %177, %178 : vector<32x32xf32>
    %180 = arith.addf %165, %179 : vector<32x32xf32>
    %181 = vector.extract_strided_slice %174 {offsets = [0, 1], sizes = [32, 1], strides = [1, 1]} : vector<32x3xf32> to vector<32x1xf32>
    %182 = vector.extract_strided_slice %1 {offsets = [19, 0], sizes = [1, 32], strides = [1, 1]} : vector<27x32xf32> to vector<1x32xf32>
    %183 = vector.broadcast %181 : vector<32x1xf32> to vector<32x32xf32>
    %184 = vector.broadcast %182 : vector<1x32xf32> to vector<32x32xf32>
    %185 = arith.mulf %183, %184 : vector<32x32xf32>
    %186 = arith.addf %180, %185 : vector<32x32xf32>
    %187 = vector.extract_strided_slice %174 {offsets = [0, 2], sizes = [32, 1], strides = [1, 1]} : vector<32x3xf32> to vector<32x1xf32>
    %188 = vector.extract_strided_slice %1 {offsets = [20, 0], sizes = [1, 32], strides = [1, 1]} : vector<27x32xf32> to vector<1x32xf32>
    %189 = vector.broadcast %187 : vector<32x1xf32> to vector<32x32xf32>
    %190 = vector.broadcast %188 : vector<1x32xf32> to vector<32x32xf32>
    %191 = arith.mulf %189, %190 : vector<32x32xf32>
    %192 = arith.addf %186, %191 : vector<32x32xf32>
    %193 = vector.extract_strided_slice %0 {offsets = [13, 0], sizes = [4, 3], strides = [1, 1]} : vector<72x3xf32> to vector<4x3xf32>
    %194 = vector.extract_strided_slice %0 {offsets = [19, 0], sizes = [4, 3], strides = [1, 1]} : vector<72x3xf32> to vector<4x3xf32>
    %195 = vector.extract_strided_slice %0 {offsets = [25, 0], sizes = [4, 3], strides = [1, 1]} : vector<72x3xf32> to vector<4x3xf32>
    %196 = vector.extract_strided_slice %0 {offsets = [31, 0], sizes = [4, 3], strides = [1, 1]} : vector<72x3xf32> to vector<4x3xf32>
    %197 = vector.extract_strided_slice %0 {offsets = [49, 0], sizes = [4, 3], strides = [1, 1]} : vector<72x3xf32> to vector<4x3xf32>
    %198 = vector.extract_strided_slice %0 {offsets = [55, 0], sizes = [4, 3], strides = [1, 1]} : vector<72x3xf32> to vector<4x3xf32>
    %199 = vector.extract_strided_slice %0 {offsets = [61, 0], sizes = [4, 3], strides = [1, 1]} : vector<72x3xf32> to vector<4x3xf32>
    %200 = vector.extract_strided_slice %0 {offsets = [67, 0], sizes = [4, 3], strides = [1, 1]} : vector<72x3xf32> to vector<4x3xf32>
    %201 = tpu.concatenate %193, %194, %195, %196, %197, %198, %199, %200 in 0 : vector<4x3xf32>, vector<4x3xf32>, vector<4x3xf32>, vector<4x3xf32>, vector<4x3xf32>, vector<4x3xf32>, vector<4x3xf32>, vector<4x3xf32> -> vector<32x3xf32>
    %202 = vector.extract_strided_slice %201 {offsets = [0, 0], sizes = [32, 1], strides = [1, 1]} : vector<32x3xf32> to vector<32x1xf32>
    %203 = vector.extract_strided_slice %1 {offsets = [21, 0], sizes = [1, 32], strides = [1, 1]} : vector<27x32xf32> to vector<1x32xf32>
    %204 = vector.broadcast %202 : vector<32x1xf32> to vector<32x32xf32>
    %205 = vector.broadcast %203 : vector<1x32xf32> to vector<32x32xf32>
    %206 = arith.mulf %204, %205 : vector<32x32xf32>
    %207 = arith.addf %192, %206 : vector<32x32xf32>
    %208 = vector.extract_strided_slice %201 {offsets = [0, 1], sizes = [32, 1], strides = [1, 1]} : vector<32x3xf32> to vector<32x1xf32>
    %209 = vector.extract_strided_slice %1 {offsets = [22, 0], sizes = [1, 32], strides = [1, 1]} : vector<27x32xf32> to vector<1x32xf32>
    %210 = vector.broadcast %208 : vector<32x1xf32> to vector<32x32xf32>
    %211 = vector.broadcast %209 : vector<1x32xf32> to vector<32x32xf32>
    %212 = arith.mulf %210, %211 : vector<32x32xf32>
    %213 = arith.addf %207, %212 : vector<32x32xf32>
    %214 = vector.extract_strided_slice %201 {offsets = [0, 2], sizes = [32, 1], strides = [1, 1]} : vector<32x3xf32> to vector<32x1xf32>
    %215 = vector.extract_strided_slice %1 {offsets = [23, 0], sizes = [1, 32], strides = [1, 1]} : vector<27x32xf32> to vector<1x32xf32>
    %216 = vector.broadcast %214 : vector<32x1xf32> to vector<32x32xf32>
    %217 = vector.broadcast %215 : vector<1x32xf32> to vector<32x32xf32>
    %218 = arith.mulf %216, %217 : vector<32x32xf32>
    %219 = arith.addf %213, %218 : vector<32x32xf32>
    %220 = vector.extract_strided_slice %0 {offsets = [14, 0], sizes = [4, 3], strides = [1, 1]} : vector<72x3xf32> to vector<4x3xf32>
    %221 = vector.extract_strided_slice %0 {offsets = [20, 0], sizes = [4, 3], strides = [1, 1]} : vector<72x3xf32> to vector<4x3xf32>
    %222 = vector.extract_strided_slice %0 {offsets = [26, 0], sizes = [4, 3], strides = [1, 1]} : vector<72x3xf32> to vector<4x3xf32>
    %223 = vector.extract_strided_slice %0 {offsets = [32, 0], sizes = [4, 3], strides = [1, 1]} : vector<72x3xf32> to vector<4x3xf32>
    %224 = vector.extract_strided_slice %0 {offsets = [50, 0], sizes = [4, 3], strides = [1, 1]} : vector<72x3xf32> to vector<4x3xf32>
    %225 = vector.extract_strided_slice %0 {offsets = [56, 0], sizes = [4, 3], strides = [1, 1]} : vector<72x3xf32> to vector<4x3xf32>
    %226 = vector.extract_strided_slice %0 {offsets = [62, 0], sizes = [4, 3], strides = [1, 1]} : vector<72x3xf32> to vector<4x3xf32>
    %227 = vector.extract_strided_slice %0 {offsets = [68, 0], sizes = [4, 3], strides = [1, 1]} : vector<72x3xf32> to vector<4x3xf32>
    %228 = tpu.concatenate %220, %221, %222, %223, %224, %225, %226, %227 in 0 : vector<4x3xf32>, vector<4x3xf32>, vector<4x3xf32>, vector<4x3xf32>, vector<4x3xf32>, vector<4x3xf32>, vector<4x3xf32>, vector<4x3xf32> -> vector<32x3xf32>
    %229 = vector.extract_strided_slice %228 {offsets = [0, 0], sizes = [32, 1], strides = [1, 1]} : vector<32x3xf32> to vector<32x1xf32>
    %230 = vector.extract_strided_slice %1 {offsets = [24, 0], sizes = [1, 32], strides = [1, 1]} : vector<27x32xf32> to vector<1x32xf32>
    %231 = vector.broadcast %229 : vector<32x1xf32> to vector<32x32xf32>
    %232 = vector.broadcast %230 : vector<1x32xf32> to vector<32x32xf32>
    %233 = arith.mulf %231, %232 : vector<32x32xf32>
    %234 = arith.addf %219, %233 : vector<32x32xf32>
    %235 = vector.extract_strided_slice %228 {offsets = [0, 1], sizes = [32, 1], strides = [1, 1]} : vector<32x3xf32> to vector<32x1xf32>
    %236 = vector.extract_strided_slice %1 {offsets = [25, 0], sizes = [1, 32], strides = [1, 1]} : vector<27x32xf32> to vector<1x32xf32>
    %237 = vector.broadcast %235 : vector<32x1xf32> to vector<32x32xf32>
    %238 = vector.broadcast %236 : vector<1x32xf32> to vector<32x32xf32>
    %239 = arith.mulf %237, %238 : vector<32x32xf32>
    %240 = arith.addf %234, %239 : vector<32x32xf32>
    %241 = vector.extract_strided_slice %228 {offsets = [0, 2], sizes = [32, 1], strides = [1, 1]} : vector<32x3xf32> to vector<32x1xf32>
    %242 = vector.extract_strided_slice %1 {offsets = [26, 0], sizes = [1, 32], strides = [1, 1]} : vector<27x32xf32> to vector<1x32xf32>
    %243 = vector.broadcast %241 : vector<32x1xf32> to vector<32x32xf32>
    %244 = vector.broadcast %242 : vector<1x32xf32> to vector<32x32xf32>
    %245 = arith.mulf %243, %244 : vector<32x32xf32>
    %246 = arith.addf %240, %245 : vector<32x32xf32>
    %c0_5 = arith.constant 0 : index
    %c0_6 = arith.constant 0 : index
    %247 = vector.load %arg2[%c0_5, %c0_6] : memref<1x32xf32, #tpu.memory_space<vmem>>, vector<1x32xf32>
    %248 = vector.broadcast %247 : vector<1x32xf32> to vector<32x32xf32>
    %249 = arith.addf %246, %248 : vector<32x32xf32>
    %cst_7 = arith.constant 0.000000e+00 : f32
    %250 = vector.broadcast %cst_7 : f32 to vector<32x32xf32>
    %251 = arith.maximumf %249, %250 : vector<32x32xf32>
    %cst_8 = arith.constant 0.000000e+00 : f32
    %252 = vector.broadcast %cst_8 : f32 to vector<8x128xf32>
    %253 = vector.extract_strided_slice %251 {offsets = [0, 0], sizes = [2, 32], strides = [1, 1]} : vector<32x32xf32> to vector<2x32xf32>
    %254 = vector.extract_strided_slice %251 {offsets = [4, 0], sizes = [2, 32], strides = [1, 1]} : vector<32x32xf32> to vector<2x32xf32>
    %255 = vector.extract_strided_slice %251 {offsets = [16, 0], sizes = [2, 32], strides = [1, 1]} : vector<32x32xf32> to vector<2x32xf32>
    %256 = vector.extract_strided_slice %251 {offsets = [20, 0], sizes = [2, 32], strides = [1, 1]} : vector<32x32xf32> to vector<2x32xf32>
    %257 = tpu.concatenate %253, %254, %255, %256 in 0 : vector<2x32xf32>, vector<2x32xf32>, vector<2x32xf32>, vector<2x32xf32> -> vector<8x32xf32>
    %258 = vector.extract_strided_slice %2 {offsets = [0, 0], sizes = [32, 128], strides = [1, 1]} : vector<288x128xf32> to vector<32x128xf32>
    %cst_9 = arith.constant dense<0.000000e+00> : vector<8x128xf32>
    %259 = tpu.matmul %257, %258, %cst_9 {dimension_numbers = #tpu.dot_dimension_numbers<[1], [0], [0], [1], [0, 0, 1, 1], [], []>} : vector<8x32xf32>, vector<32x128xf32>, vector<8x128xf32> -> vector<8x128xf32>
    %260 = arith.addf %252, %259 : vector<8x128xf32>
    %261 = vector.extract_strided_slice %251 {offsets = [1, 0], sizes = [2, 32], strides = [1, 1]} : vector<32x32xf32> to vector<2x32xf32>
    %262 = vector.extract_strided_slice %251 {offsets = [5, 0], sizes = [2, 32], strides = [1, 1]} : vector<32x32xf32> to vector<2x32xf32>
    %263 = vector.extract_strided_slice %251 {offsets = [17, 0], sizes = [2, 32], strides = [1, 1]} : vector<32x32xf32> to vector<2x32xf32>
    %264 = vector.extract_strided_slice %251 {offsets = [21, 0], sizes = [2, 32], strides = [1, 1]} : vector<32x32xf32> to vector<2x32xf32>
    %265 = tpu.concatenate %261, %262, %263, %264 in 0 : vector<2x32xf32>, vector<2x32xf32>, vector<2x32xf32>, vector<2x32xf32> -> vector<8x32xf32>
    %266 = vector.extract_strided_slice %2 {offsets = [32, 0], sizes = [32, 128], strides = [1, 1]} : vector<288x128xf32> to vector<32x128xf32>
    %cst_10 = arith.constant dense<0.000000e+00> : vector<8x128xf32>
    %267 = tpu.matmul %265, %266, %cst_10 {dimension_numbers = #tpu.dot_dimension_numbers<[1], [0], [0], [1], [0, 0, 1, 1], [], []>} : vector<8x32xf32>, vector<32x128xf32>, vector<8x128xf32> -> vector<8x128xf32>
    %268 = arith.addf %260, %267 : vector<8x128xf32>
    %269 = vector.extract_strided_slice %251 {offsets = [2, 0], sizes = [2, 32], strides = [1, 1]} : vector<32x32xf32> to vector<2x32xf32>
    %270 = vector.extract_strided_slice %251 {offsets = [6, 0], sizes = [2, 32], strides = [1, 1]} : vector<32x32xf32> to vector<2x32xf32>
    %271 = vector.extract_strided_slice %251 {offsets = [18, 0], sizes = [2, 32], strides = [1, 1]} : vector<32x32xf32> to vector<2x32xf32>
    %272 = vector.extract_strided_slice %251 {offsets = [22, 0], sizes = [2, 32], strides = [1, 1]} : vector<32x32xf32> to vector<2x32xf32>
    %273 = tpu.concatenate %269, %270, %271, %272 in 0 : vector<2x32xf32>, vector<2x32xf32>, vector<2x32xf32>, vector<2x32xf32> -> vector<8x32xf32>
    %274 = vector.extract_strided_slice %2 {offsets = [64, 0], sizes = [32, 128], strides = [1, 1]} : vector<288x128xf32> to vector<32x128xf32>
    %cst_11 = arith.constant dense<0.000000e+00> : vector<8x128xf32>
    %275 = tpu.matmul %273, %274, %cst_11 {dimension_numbers = #tpu.dot_dimension_numbers<[1], [0], [0], [1], [0, 0, 1, 1], [], []>} : vector<8x32xf32>, vector<32x128xf32>, vector<8x128xf32> -> vector<8x128xf32>
    %276 = arith.addf %268, %275 : vector<8x128xf32>
    %277 = vector.extract_strided_slice %251 {offsets = [4, 0], sizes = [2, 32], strides = [1, 1]} : vector<32x32xf32> to vector<2x32xf32>
    %278 = vector.extract_strided_slice %251 {offsets = [8, 0], sizes = [2, 32], strides = [1, 1]} : vector<32x32xf32> to vector<2x32xf32>
    %279 = vector.extract_strided_slice %251 {offsets = [20, 0], sizes = [2, 32], strides = [1, 1]} : vector<32x32xf32> to vector<2x32xf32>
    %280 = vector.extract_strided_slice %251 {offsets = [24, 0], sizes = [2, 32], strides = [1, 1]} : vector<32x32xf32> to vector<2x32xf32>
    %281 = tpu.concatenate %277, %278, %279, %280 in 0 : vector<2x32xf32>, vector<2x32xf32>, vector<2x32xf32>, vector<2x32xf32> -> vector<8x32xf32>
    %282 = vector.extract_strided_slice %2 {offsets = [96, 0], sizes = [32, 128], strides = [1, 1]} : vector<288x128xf32> to vector<32x128xf32>
    %cst_12 = arith.constant dense<0.000000e+00> : vector<8x128xf32>
    %283 = tpu.matmul %281, %282, %cst_12 {dimension_numbers = #tpu.dot_dimension_numbers<[1], [0], [0], [1], [0, 0, 1, 1], [], []>} : vector<8x32xf32>, vector<32x128xf32>, vector<8x128xf32> -> vector<8x128xf32>
    %284 = arith.addf %276, %283 : vector<8x128xf32>
    %285 = vector.extract_strided_slice %251 {offsets = [5, 0], sizes = [2, 32], strides = [1, 1]} : vector<32x32xf32> to vector<2x32xf32>
    %286 = vector.extract_strided_slice %251 {offsets = [9, 0], sizes = [2, 32], strides = [1, 1]} : vector<32x32xf32> to vector<2x32xf32>
    %287 = vector.extract_strided_slice %251 {offsets = [21, 0], sizes = [2, 32], strides = [1, 1]} : vector<32x32xf32> to vector<2x32xf32>
    %288 = vector.extract_strided_slice %251 {offsets = [25, 0], sizes = [2, 32], strides = [1, 1]} : vector<32x32xf32> to vector<2x32xf32>
    %289 = tpu.concatenate %285, %286, %287, %288 in 0 : vector<2x32xf32>, vector<2x32xf32>, vector<2x32xf32>, vector<2x32xf32> -> vector<8x32xf32>
    %290 = vector.extract_strided_slice %2 {offsets = [128, 0], sizes = [32, 128], strides = [1, 1]} : vector<288x128xf32> to vector<32x128xf32>
    %cst_13 = arith.constant dense<0.000000e+00> : vector<8x128xf32>
    %291 = tpu.matmul %289, %290, %cst_13 {dimension_numbers = #tpu.dot_dimension_numbers<[1], [0], [0], [1], [0, 0, 1, 1], [], []>} : vector<8x32xf32>, vector<32x128xf32>, vector<8x128xf32> -> vector<8x128xf32>
    %292 = arith.addf %284, %291 : vector<8x128xf32>
    %293 = vector.extract_strided_slice %251 {offsets = [6, 0], sizes = [2, 32], strides = [1, 1]} : vector<32x32xf32> to vector<2x32xf32>
    %294 = vector.extract_strided_slice %251 {offsets = [10, 0], sizes = [2, 32], strides = [1, 1]} : vector<32x32xf32> to vector<2x32xf32>
    %295 = vector.extract_strided_slice %251 {offsets = [22, 0], sizes = [2, 32], strides = [1, 1]} : vector<32x32xf32> to vector<2x32xf32>
    %296 = vector.extract_strided_slice %251 {offsets = [26, 0], sizes = [2, 32], strides = [1, 1]} : vector<32x32xf32> to vector<2x32xf32>
    %297 = tpu.concatenate %293, %294, %295, %296 in 0 : vector<2x32xf32>, vector<2x32xf32>, vector<2x32xf32>, vector<2x32xf32> -> vector<8x32xf32>
    %298 = vector.extract_strided_slice %2 {offsets = [160, 0], sizes = [32, 128], strides = [1, 1]} : vector<288x128xf32> to vector<32x128xf32>
    %cst_14 = arith.constant dense<0.000000e+00> : vector<8x128xf32>
    %299 = tpu.matmul %297, %298, %cst_14 {dimension_numbers = #tpu.dot_dimension_numbers<[1], [0], [0], [1], [0, 0, 1, 1], [], []>} : vector<8x32xf32>, vector<32x128xf32>, vector<8x128xf32> -> vector<8x128xf32>
    %300 = arith.addf %292, %299 : vector<8x128xf32>
    %301 = vector.extract_strided_slice %251 {offsets = [8, 0], sizes = [2, 32], strides = [1, 1]} : vector<32x32xf32> to vector<2x32xf32>
    %302 = vector.extract_strided_slice %251 {offsets = [12, 0], sizes = [2, 32], strides = [1, 1]} : vector<32x32xf32> to vector<2x32xf32>
    %303 = vector.extract_strided_slice %251 {offsets = [24, 0], sizes = [2, 32], strides = [1, 1]} : vector<32x32xf32> to vector<2x32xf32>
    %304 = vector.extract_strided_slice %251 {offsets = [28, 0], sizes = [2, 32], strides = [1, 1]} : vector<32x32xf32> to vector<2x32xf32>
    %305 = tpu.concatenate %301, %302, %303, %304 in 0 : vector<2x32xf32>, vector<2x32xf32>, vector<2x32xf32>, vector<2x32xf32> -> vector<8x32xf32>
    %306 = vector.extract_strided_slice %2 {offsets = [192, 0], sizes = [32, 128], strides = [1, 1]} : vector<288x128xf32> to vector<32x128xf32>
    %cst_15 = arith.constant dense<0.000000e+00> : vector<8x128xf32>
    %307 = tpu.matmul %305, %306, %cst_15 {dimension_numbers = #tpu.dot_dimension_numbers<[1], [0], [0], [1], [0, 0, 1, 1], [], []>} : vector<8x32xf32>, vector<32x128xf32>, vector<8x128xf32> -> vector<8x128xf32>
    %308 = arith.addf %300, %307 : vector<8x128xf32>
    %309 = vector.extract_strided_slice %251 {offsets = [9, 0], sizes = [2, 32], strides = [1, 1]} : vector<32x32xf32> to vector<2x32xf32>
    %310 = vector.extract_strided_slice %251 {offsets = [13, 0], sizes = [2, 32], strides = [1, 1]} : vector<32x32xf32> to vector<2x32xf32>
    %311 = vector.extract_strided_slice %251 {offsets = [25, 0], sizes = [2, 32], strides = [1, 1]} : vector<32x32xf32> to vector<2x32xf32>
    %312 = vector.extract_strided_slice %251 {offsets = [29, 0], sizes = [2, 32], strides = [1, 1]} : vector<32x32xf32> to vector<2x32xf32>
    %313 = tpu.concatenate %309, %310, %311, %312 in 0 : vector<2x32xf32>, vector<2x32xf32>, vector<2x32xf32>, vector<2x32xf32> -> vector<8x32xf32>
    %314 = vector.extract_strided_slice %2 {offsets = [224, 0], sizes = [32, 128], strides = [1, 1]} : vector<288x128xf32> to vector<32x128xf32>
    %cst_16 = arith.constant dense<0.000000e+00> : vector<8x128xf32>
    %315 = tpu.matmul %313, %314, %cst_16 {dimension_numbers = #tpu.dot_dimension_numbers<[1], [0], [0], [1], [0, 0, 1, 1], [], []>} : vector<8x32xf32>, vector<32x128xf32>, vector<8x128xf32> -> vector<8x128xf32>
    %316 = arith.addf %308, %315 : vector<8x128xf32>
    %317 = vector.extract_strided_slice %251 {offsets = [10, 0], sizes = [2, 32], strides = [1, 1]} : vector<32x32xf32> to vector<2x32xf32>
    %318 = vector.extract_strided_slice %251 {offsets = [14, 0], sizes = [2, 32], strides = [1, 1]} : vector<32x32xf32> to vector<2x32xf32>
    %319 = vector.extract_strided_slice %251 {offsets = [26, 0], sizes = [2, 32], strides = [1, 1]} : vector<32x32xf32> to vector<2x32xf32>
    %320 = vector.extract_strided_slice %251 {offsets = [30, 0], sizes = [2, 32], strides = [1, 1]} : vector<32x32xf32> to vector<2x32xf32>
    %321 = tpu.concatenate %317, %318, %319, %320 in 0 : vector<2x32xf32>, vector<2x32xf32>, vector<2x32xf32>, vector<2x32xf32> -> vector<8x32xf32>
    %322 = vector.extract_strided_slice %2 {offsets = [256, 0], sizes = [32, 128], strides = [1, 1]} : vector<288x128xf32> to vector<32x128xf32>
    %cst_17 = arith.constant dense<0.000000e+00> : vector<8x128xf32>
    %323 = tpu.matmul %321, %322, %cst_17 {dimension_numbers = #tpu.dot_dimension_numbers<[1], [0], [0], [1], [0, 0, 1, 1], [], []>} : vector<8x32xf32>, vector<32x128xf32>, vector<8x128xf32> -> vector<8x128xf32>
    %324 = arith.addf %316, %323 : vector<8x128xf32>
    %c0_18 = arith.constant 0 : index
    %c0_19 = arith.constant 0 : index
    %325 = vector.load %arg4[%c0_18, %c0_19] : memref<1x128xf32, #tpu.memory_space<vmem>>, vector<1x128xf32>
    %326 = vector.broadcast %325 : vector<1x128xf32> to vector<8x128xf32>
    %327 = arith.addf %324, %326 : vector<8x128xf32>
    %cst_20 = arith.constant 0.000000e+00 : f32
    %328 = vector.broadcast %cst_20 : f32 to vector<8x128xf32>
    %329 = arith.maximumf %327, %328 : vector<8x128xf32>
    %330 = vector.extract_strided_slice %329 {offsets = [0, 0], sizes = [1, 128], strides = [1, 1]} : vector<8x128xf32> to vector<1x128xf32>
    %331 = vector.extract_strided_slice %329 {offsets = [1, 0], sizes = [1, 128], strides = [1, 1]} : vector<8x128xf32> to vector<1x128xf32>
    %332 = arith.maximumf %330, %331 : vector<1x128xf32>
    %333 = vector.extract_strided_slice %329 {offsets = [2, 0], sizes = [1, 128], strides = [1, 1]} : vector<8x128xf32> to vector<1x128xf32>
    %334 = arith.maximumf %332, %333 : vector<1x128xf32>
    %335 = vector.extract_strided_slice %329 {offsets = [3, 0], sizes = [1, 128], strides = [1, 1]} : vector<8x128xf32> to vector<1x128xf32>
    %336 = arith.maximumf %334, %335 : vector<1x128xf32>
    %337 = vector.extract_strided_slice %329 {offsets = [4, 0], sizes = [1, 128], strides = [1, 1]} : vector<8x128xf32> to vector<1x128xf32>
    %338 = vector.extract_strided_slice %329 {offsets = [5, 0], sizes = [1, 128], strides = [1, 1]} : vector<8x128xf32> to vector<1x128xf32>
    %339 = arith.maximumf %337, %338 : vector<1x128xf32>
    %340 = vector.extract_strided_slice %329 {offsets = [6, 0], sizes = [1, 128], strides = [1, 1]} : vector<8x128xf32> to vector<1x128xf32>
    %341 = arith.maximumf %339, %340 : vector<1x128xf32>
    %342 = vector.extract_strided_slice %329 {offsets = [7, 0], sizes = [1, 128], strides = [1, 1]} : vector<8x128xf32> to vector<1x128xf32>
    %343 = arith.maximumf %341, %342 : vector<1x128xf32>
    %344 = tpu.concatenate %336, %343 in 0 : vector<1x128xf32>, vector<1x128xf32> -> vector<2x128xf32>
    %c0_21 = arith.constant 0 : index
    %c0_22 = arith.constant 0 : index
    %345 = vector.load %arg5[%c0_21, %c0_22] : memref<128x128xf32, #tpu.memory_space<vmem>>, vector<128x128xf32>
    %cst_23 = arith.constant dense<0.000000e+00> : vector<2x128xf32>
    %346 = tpu.matmul %344, %345, %cst_23 {dimension_numbers = #tpu.dot_dimension_numbers<[1], [0], [0], [1], [0, 0, 1, 1], [], []>} : vector<2x128xf32>, vector<128x128xf32>, vector<2x128xf32> -> vector<2x128xf32>
    %c0_24 = arith.constant 0 : index
    %c0_25 = arith.constant 0 : index
    %347 = vector.load %arg6[%c0_24, %c0_25] : memref<1x128xf32, #tpu.memory_space<vmem>>, vector<1x128xf32>
    %348 = vector.broadcast %347 : vector<1x128xf32> to vector<2x128xf32>
    %349 = arith.addf %346, %348 : vector<2x128xf32>
    %cst_26 = arith.constant 0.000000e+00 : f32
    %350 = vector.broadcast %cst_26 : f32 to vector<2x128xf32>
    %351 = arith.maximumf %349, %350 : vector<2x128xf32>
    %c0_27 = arith.constant 0 : index
    %c0_28 = arith.constant 0 : index
    %352 = vector.load %arg7[%c0_27, %c0_28] : memref<128x10xf32, #tpu.memory_space<vmem>>, vector<128x10xf32>
    %cst_29 = arith.constant dense<0.000000e+00> : vector<2x10xf32>
    %353 = tpu.matmul %351, %352, %cst_29 {dimension_numbers = #tpu.dot_dimension_numbers<[1], [0], [0], [1], [0, 0, 1, 1], [], []>} : vector<2x128xf32>, vector<128x10xf32>, vector<2x10xf32> -> vector<2x10xf32>
    %c0_30 = arith.constant 0 : index
    %c0_31 = arith.constant 0 : index
    %354 = vector.load %arg8[%c0_30, %c0_31] : memref<1x10xf32, #tpu.memory_space<vmem>>, vector<1x10xf32>
    %355 = vector.broadcast %354 : vector<1x10xf32> to vector<2x10xf32>
    %356 = arith.addf %353, %355 : vector<2x10xf32>
    %cst_32 = arith.constant dense<0xFF800000> : vector<2xf32>
    %357 = vector.multi_reduction <maximumf>, %356, %cst_32 [1] : vector<2x10xf32> to vector<2xf32>
    %358 = vector.shape_cast %357 : vector<2xf32> to vector<2x1xf32>
    %359 = vector.broadcast %358 : vector<2x1xf32> to vector<2x10xf32>
    %360 = arith.subf %356, %359 : vector<2x10xf32>
    %361 = math.exp %360 : vector<2x10xf32>
    %cst_33 = arith.constant dense<0.000000e+00> : vector<2xf32>
    %362 = vector.multi_reduction <add>, %361, %cst_33 [1] : vector<2x10xf32> to vector<2xf32>
    %363 = vector.shape_cast %362 : vector<2xf32> to vector<2x1xf32>
    %364 = math.log %363 : vector<2x1xf32>
    %365 = arith.addf %358, %364 : vector<2x1xf32>
    %366 = vector.broadcast %365 : vector<2x1xf32> to vector<2x10xf32>
    %367 = arith.subf %356, %366 : vector<2x10xf32>
    %c0_34 = arith.constant 0 : index
    %c0_35 = arith.constant 0 : index
    %368 = vector.load %arg9[%c0_34, %c0_35] : memref<2x10xf32, #tpu.memory_space<vmem>>, vector<2x10xf32>
    tpu.vector_store %arg9[%c0_34, %c0_35], %367 {strides = array<i32>} : memref<2x10xf32, #tpu.memory_space<vmem>>, vector<2x10xf32>,
    return
  }
}

</mosaic_0001>

<llo_original>
// kernel: cnn_forward.1
$region0: #{cnn_forward.1}
  #allocation0 [shape = 'u32[]', space=smem, size = 0x4, offset = 0x4, fixed_abs, tag = 'smem constant byte address 0x4 - core index']
  #allocation1 [shape = 'u32[144,128]{1,0:T(1,128)}', space=vmem, size = 0x12000, scoped, tag = 'internal scratch']
  %s0 = inlined_call_operand.vmem [shape: f32[72,3], index: 0, kind: input, shape index: {}]
  %s1 = inlined_call_operand.vmem [shape: f32[27,32], index: 1, kind: input, shape index: {}]
  %s2 = inlined_call_operand.vmem [shape: f32[1,32], index: 2, kind: input, shape index: {}]
  %s3 = inlined_call_operand.vmem [shape: f32[288,128], index: 3, kind: input, shape index: {}]
  %s4 = inlined_call_operand.vmem [shape: f32[1,128], index: 4, kind: input, shape index: {}]
  %s5 = inlined_call_operand.hbm [shape: f32[128,128], index: 5, kind: input, shape index: {}]
  %s6 = inlined_call_operand.vmem [shape: f32[1,128], index: 6, kind: input, shape index: {}]
  %s7 = inlined_call_operand.vmem [shape: f32[128,10], index: 7, kind: input, shape index: {}]
  %s8 = inlined_call_operand.vmem [shape: f32[1,10], index: 8, kind: input, shape index: {}]
  %s9 = inlined_call_operand.hbm [shape: f32[2,10], index: 9, kind: output, shape index: {}]
  %s10 = sld [smem:[#allocation0]]
  $region50: #{cnn_forward.1} parent=0
    _
  %s12 = ssub.s32 1, %s10
  %s13 = scalar_select 0, %s12, %s10
  $region1: #{cnn_forward.1} parent=0
    #allocation2 [shape = 'u8[65536]{0}', space=vmem, size = 0x10000, scoped, tag = 'input window, operand 5, single buffered']
    #allocation3 [shape = 's32[1]{0}', space=sflag, size = 0x4, scoped, tag = 'scoped memory for cnn_forward.1']
    #allocation4 [shape = 's32[1]{0}', space=sflag, size = 0x4, scoped, tag = 'scoped memory for cnn_forward.1']
    #allocation5 [shape = 'u8[1024]{0}', space=vmem, size = 0x400, scoped, tag = 'output window, operand 0, single buffered']
    %14 = vsyncpa [#allocation3], 0
    %15 = vsyncpa [#allocation4], 0
    // Predicated region
    $region2: #{cnn_forward.1} parent=1 // pred_check
      _
    $region3: #{cnn_forward.1} parent=1 // pred_check_branch
      %17 = sbr.rel (0) target = $region5
    $region4: #{cnn_forward.1} parent=1 // pred_region
      _
    $region5: #{cnn_forward.1} parent=1 // pred_fallthru
      _
    // Predicated region
    $region6: #{cnn_forward.1} parent=1 // pred_check
      _
    $region7: #{cnn_forward.1} parent=1 // pred_check_branch
      %19 = sbr.rel (0) target = $region9
    $region8: #{cnn_forward.1} parent=1 // pred_region
      _
    $region9: #{cnn_forward.1} parent=1 // pred_fallthru
      _
    // Predicated region
    $region10: #{cnn_forward.1} parent=1 // pred_check
      _
    $region11: #{cnn_forward.1} parent=1 // pred_check_branch
      %21 = sbr.rel (0) target = $region13
    $region12: #{cnn_forward.1} parent=1 // pred_region
      _
    $region13: #{cnn_forward.1} parent=1 // pred_fallthru
      _
    // Predicated region
    $region14: #{cnn_forward.1} parent=1 // pred_check
      _
    $region15: #{cnn_forward.1} parent=1 // pred_check_branch
      %23 = sbr.rel (0) target = $region17
    $region16: #{cnn_forward.1} parent=1 // pred_region
      _
    $region17: #{cnn_forward.1} parent=1 // pred_fallthru
      _
    // Predicated region
    $region18: #{cnn_forward.1} parent=1 // pred_check
      _
    $region19: #{cnn_forward.1} parent=1 // pred_check_branch
      %25 = sbr.rel (0) target = $region21
    $region20: #{cnn_forward.1} parent=1 // pred_region
      _
    $region21: #{cnn_forward.1} parent=1 // pred_fallthru
      _
    // Predicated region
    $region22: #{cnn_forward.1} parent=1 // pred_check
      _
    $region23: #{cnn_forward.1} parent=1 // pred_check_branch
      %27 = sbr.rel (0) target = $region25
    $region24: #{cnn_forward.1} parent=1 // pred_region
      %s29 = ssub.s32 2048, 2048
      %30 = vsyncadd [#allocation3], %s29
      %s31 = sshll.u32 [#allocation2], 4
      %s32 = int_to_ptr.vmem [resolvable:$true] %s31
      %37 = dma.hbm_to_vmem [thread:$0]  %s5, 2048, %s32, [#allocation3], 128, 128, 8
    $region25: #{cnn_forward.1} parent=1 // pred_fallthru
      _
    // Predicated region
    $region26: #{cnn_forward.1} parent=1 // pred_check
      _
    $region27: #{cnn_forward.1} parent=1 // pred_check_branch
      %39 = sbr.rel (0) target = $region29
    $region28: #{cnn_forward.1} parent=1 // pred_region
      _
    $region29: #{cnn_forward.1} parent=1 // pred_fallthru
      _
    // Predicated region
    $region30: #{cnn_forward.1} parent=1 // pred_check
      _
    $region31: #{cnn_forward.1} parent=1 // pred_check_branch
      %41 = sbr.rel (0) target = $region33
    $region32: #{cnn_forward.1} parent=1 // pred_region
      _
    $region33: #{cnn_forward.1} parent=1 // pred_fallthru
      _
    // Predicated region
    $region34: #{cnn_forward.1} parent=1 // pred_check
      _
    $region35: #{cnn_forward.1} parent=1 // pred_check_branch
      %43 = sbr.rel (0) target = $region37
    $region36: #{cnn_forward.1} parent=1 // pred_region
      _
    $region37: #{cnn_forward.1} parent=1 // pred_fallthru
      _
    // Predicated region
    $region38: #{cnn_forward.1} parent=1 // pred_check
      _
    $region39: #{cnn_forward.1} parent=1 // pred_check_branch
      %45 = sbr.rel (0) target = $region41
    $region40: #{cnn_forward.1} parent=1 // pred_region
      %46 = dma.done [#allocation3], 2048
    $region41: #{cnn_forward.1} parent=1 // pred_fallthru
      _
    %v47 = vld [vmem:[%s0] sm:$0xff]
    %v48 = vld [vmem:[%s0 + $0x8] sm:$0xff]
    %v49 = vld [vmem:[%s0 + $0x10] sm:$0xff]
    %v50 = vld [vmem:[%s0 + $0x18] sm:$0xff]
    %v51 = vld [vmem:[%s0 + $0x20] sm:$0xff]
    %v52 = vld [vmem:[%s0 + $0x28] sm:$0xff]
    %v53 = vld [vmem:[%s0 + $0x30] sm:$0xff]
    %v54 = vld [vmem:[%s0 + $0x38] sm:$0xff]
    %v55 = vld [vmem:[%s0 + $0x40] sm:$0xff]
    %v56 = vld [vmem:[%s1] sm:$0xff]
    %v57 = vld [vmem:[%s1 + $0x8] sm:$0xff]
    %v58 = vld [vmem:[%s1 + $0x10] sm:$0xff]
    %v59 = vld [vmem:[%s1 + $0x18] sm:$0x7]
    %v60 = vld [vmem:[%s3] sm:$0xff]
    %v61 = vld [vmem:[%s3 + $0x8] sm:$0xff]
    %v62 = vld [vmem:[%s3 + $0x10] sm:$0xff]
    %v63 = vld [vmem:[%s3 + $0x18] sm:$0xff]
    %v64 = vld [vmem:[%s3 + $0x20] sm:$0xff]
    %v65 = vld [vmem:[%s3 + $0x28] sm:$0xff]
    %v66 = vld [vmem:[%s3 + $0x30] sm:$0xff]
    %v67 = vld [vmem:[%s3 + $0x38] sm:$0xff]
    %v68 = vld [vmem:[%s3 + $0x40] sm:$0xff]
    %v69 = vld [vmem:[%s3 + $0x48] sm:$0xff]
    %v70 = vld [vmem:[%s3 + $0x50] sm:$0xff]
    %v71 = vld [vmem:[%s3 + $0x58] sm:$0xff]
    %v72 = vld [vmem:[%s3 + $0x60] sm:$0xff]
    %v73 = vld [vmem:[%s3 + $0x68] sm:$0xff]
    %v74 = vld [vmem:[%s3 + $0x70] sm:$0xff]
    %v75 = vld [vmem:[%s3 + $0x78] sm:$0xff]
    %v76 = vld [vmem:[%s3 + $0x80] sm:$0xff]
    %v77 = vld [vmem:[%s3 + $0x88] sm:$0xff]
    %v78 = vld [vmem:[%s3 + $0x90] sm:$0xff]
    %v79 = vld [vmem:[%s3 + $0x98] sm:$0xff]
    %v80 = vld [vmem:[%s3 + $0xa0] sm:$0xff]
    %v81 = vld [vmem:[%s3 + $0xa8] sm:$0xff]
    %v82 = vld [vmem:[%s3 + $0xb0] sm:$0xff]
    %v83 = vld [vmem:[%s3 + $0xb8] sm:$0xff]
    %v84 = vld [vmem:[%s3 + $0xc0] sm:$0xff]
    %v85 = vld [vmem:[%s3 + $0xc8] sm:$0xff]
    %v86 = vld [vmem:[%s3 + $0xd0] sm:$0xff]
    %v87 = vld [vmem:[%s3 + $0xd8] sm:$0xff]
    %v88 = vld [vmem:[%s3 + $0xe0] sm:$0xff]
    %v89 = vld [vmem:[%s3 + $0xe8] sm:$0xff]
    %v90 = vld [vmem:[%s3 + $0xf0] sm:$0xff]
    %v91 = vld [vmem:[%s3 + $0xf8] sm:$0xff]
    %v92 = vld [vmem:[%s3 + $0x100] sm:$0xff]
    %v93 = vld [vmem:[%s3 + $0x108] sm:$0xff]
    %v94 = vld [vmem:[%s3 + $0x110] sm:$0xff]
    %v95 = vld [vmem:[%s3 + $0x118] sm:$0xff]
    %vm98 = vcmask 1045504
    %v99 = vrot.slane %v47, 2
    %v100 = vrot.slane %v48, 2
    %v101 = vsel %vm98, %v99, %v100
    %v103 = vrot.slane %v48, 4
    %v106 = vrot.slane %v49, 6
    %v109 = vrot.slane %v51, 4
    %v112 = vrot.slane %v52, 6
    %v116 = vrot.slane %v53, 2
    %v117 = vrot.slane %v54, 2
    %v118 = vsel %vm98, %v116, %v117
    %vm120 = vcmask 1043456
    %v121 = vsel %vm120, %v47, %v101
    %v122 = vsel %vm120, %v103, %v106
    %v123 = vsel %vm120, %v109, %v112
    %v124 = vsel %vm120, %v53, %v118
    %126 = vset.pattern.permute.xlu0 0
    %127 = vperm.xlu0 %126, %v121
    %v128 = vpop.permute.xlu0 %127
    %131 = vset.pattern.permute.xlu0 0
    %132 = vperm.xlu0 %131, %v122
    %v133 = vpop.permute.xlu0 %132
    %136 = vset.pattern.permute.xlu0 0
    %137 = vperm.xlu0 %136, %v123
    %v138 = vpop.permute.xlu0 %137
    %141 = vset.pattern.permute.xlu0 0
    %142 = vperm.xlu0 %141, %v124
    %v143 = vpop.permute.xlu0 %142
    %v145 = vlaneseq
    %v146 = vshrl.u32 %v145, 7
    %v147 = vsub.s32 0, %v146
    %v148 = vrot.slane %v56, %v147
    %v149 = vmul.f32 %v128, %v148
    %v150 = vmul.f32 %v133, %v148
    %v151 = vmul.f32 %v138, %v148
    %v152 = vmul.f32 %v143, %v148
    %v153 = vadd.f32 %v149, 0.0
    %v154 = vadd.f32 %v150, 0.0
    %v155 = vadd.f32 %v151, 0.0
    %v156 = vadd.f32 %v152, 0.0
    %157 = vset.pattern.permute.xlu0 1
    %158 = vperm.xlu0 %157, %v121
    %v159 = vpop.permute.xlu0 %158
    %161 = vset.pattern.permute.xlu0 1
    %162 = vperm.xlu0 %161, %v122
    %v163 = vpop.permute.xlu0 %162
    %165 = vset.pattern.permute.xlu0 1
    %166 = vperm.xlu0 %165, %v123
    %v167 = vpop.permute.xlu0 %166
    %169 = vset.pattern.permute.xlu0 1
    %170 = vperm.xlu0 %169, %v124
    %v171 = vpop.permute.xlu0 %170
    %v173 = vlaneseq
    %v174 = vshrl.u32 %v173, 7
    %v175 = vsub.s32 1, %v174
    %v176 = vrot.slane %v56, %v175
    %v177 = vmul.f32 %v159, %v176
    %v178 = vmul.f32 %v163, %v176
    %v179 = vmul.f32 %v167, %v176
    %v180 = vmul.f32 %v171, %v176
    %v181 = vadd.f32 %v153, %v177
    %v182 = vadd.f32 %v154, %v178
    %v183 = vadd.f32 %v155, %v179
    %v184 = vadd.f32 %v156, %v180
    %185 = vset.pattern.permute.xlu0 2
    %186 = vperm.xlu0 %185, %v121
    %v187 = vpop.permute.xlu0 %186
    %189 = vset.pattern.permute.xlu0 2
    %190 = vperm.xlu0 %189, %v122
    %v191 = vpop.permute.xlu0 %190
    %193 = vset.pattern.permute.xlu0 2
    %194 = vperm.xlu0 %193, %v123
    %v195 = vpop.permute.xlu0 %194
    %197 = vset.pattern.permute.xlu0 2
    %198 = vperm.xlu0 %197, %v124
    %v199 = vpop.permute.xlu0 %198
    %v201 = vlaneseq
    %v202 = vshrl.u32 %v201, 7
    %v203 = vsub.s32 2, %v202
    %v204 = vrot.slane %v56, %v203
    %v205 = vmul.f32 %v187, %v204
    %v206 = vmul.f32 %v191, %v204
    %v207 = vmul.f32 %v195, %v204
    %v208 = vmul.f32 %v199, %v204
    %v209 = vadd.f32 %v181, %v205
    %v210 = vadd.f32 %v182, %v206
    %v211 = vadd.f32 %v183, %v207
    %v212 = vadd.f32 %v184, %v208
    %v213 = vrot.slane %v47, 1
    %vm215 = vcmask 1044480
    %v216 = vrot.slane %v47, 3
    %v217 = vrot.slane %v48, 3
    %v218 = vsel %vm215, %v216, %v217
    %vm220 = vcmask 1042432
    %v221 = vrot.slane %v48, 5
    %v222 = vrot.slane %v49, 5
    %v223 = vsel %vm220, %v221, %v222
    %v225 = vrot.slane %v49, 7
    %v227 = vrot.slane %v51, 5
    %v228 = vrot.slane %v52, 5
    %v229 = vsel %vm220, %v227, %v228
    %v231 = vrot.slane %v52, 7
    %v233 = vrot.slane %v53, 1
    %v235 = vrot.slane %v53, 3
    %v236 = vrot.slane %v54, 3
    %v237 = vsel %vm215, %v235, %v236
    %v239 = vsel %vm120, %v213, %v218
    %v240 = vsel %vm120, %v223, %v225
    %v241 = vsel %vm120, %v229, %v231
    %v242 = vsel %vm120, %v233, %v237
    %244 = vset.pattern.permute.xlu0 0
    %245 = vperm.xlu0 %244, %v239
    %v246 = vpop.permute.xlu0 %245
    %249 = vset.pattern.permute.xlu0 0
    %250 = vperm.xlu0 %249, %v240
    %v251 = vpop.permute.xlu0 %250
    %254 = vset.pattern.permute.xlu0 0
    %255 = vperm.xlu0 %254, %v241
    %v256 = vpop.permute.xlu0 %255
    %259 = vset.pattern.permute.xlu0 0
    %260 = vperm.xlu0 %259, %v242
    %v261 = vpop.permute.xlu0 %260
    %v263 = vlaneseq
    %v264 = vshrl.u32 %v263, 7
    %v265 = vsub.s32 3, %v264
    %v266 = vrot.slane %v56, %v265
    %v267 = vmul.f32 %v246, %v266
    %v268 = vmul.f32 %v251, %v266
    %v269 = vmul.f32 %v256, %v266
    %v270 = vmul.f32 %v261, %v266
    %v271 = vadd.f32 %v209, %v267
    %v272 = vadd.f32 %v210, %v268
    %v273 = vadd.f32 %v211, %v269
    %v274 = vadd.f32 %v212, %v270
    %275 = vset.pattern.permute.xlu0 1
    %276 = vperm.xlu0 %275, %v239
    %v277 = vpop.permute.xlu0 %276
    %279 = vset.pattern.permute.xlu0 1
    %280 = vperm.xlu0 %279, %v240
    %v281 = vpop.permute.xlu0 %280
    %283 = vset.pattern.permute.xlu0 1
    %284 = vperm.xlu0 %283, %v241
    %v285 = vpop.permute.xlu0 %284
    %287 = vset.pattern.permute.xlu0 1
    %288 = vperm.xlu0 %287, %v242
    %v289 = vpop.permute.xlu0 %288
    %v291 = vlaneseq
    %v292 = vshrl.u32 %v291, 7
    %v293 = vsub.s32 4, %v292
    %v294 = vrot.slane %v56, %v293
    %v295 = vmul.f32 %v277, %v294
    %v296 = vmul.f32 %v281, %v294
    %v297 = vmul.f32 %v285, %v294
    %v298 = vmul.f32 %v289, %v294
    %v299 = vadd.f32 %v271, %v295
    %v300 = vadd.f32 %v272, %v296
    %v301 = vadd.f32 %v273, %v297
    %v302 = vadd.f32 %v274, %v298
    %303 = vset.pattern.permute.xlu0 2
    %304 = vperm.xlu0 %303, %v239
    %v305 = vpop.permute.xlu0 %304
    %307 = vset.pattern.permute.xlu0 2
    %308 = vperm.xlu0 %307, %v240
    %v309 = vpop.permute.xlu0 %308
    %311 = vset.pattern.permute.xlu0 2
    %312 = vperm.xlu0 %311, %v241
    %v313 = vpop.permute.xlu0 %312
    %315 = vset.pattern.permute.xlu0 2
    %316 = vperm.xlu0 %315, %v242
    %v317 = vpop.permute.xlu0 %316
    %v319 = vlaneseq
    %v320 = vshrl.u32 %v319, 7
    %v321 = vsub.s32 5, %v320
    %v322 = vrot.slane %v56, %v321
    %v323 = vmul.f32 %v305, %v322
    %v324 = vmul.f32 %v309, %v322
    %v325 = vmul.f32 %v313, %v322
    %v326 = vmul.f32 %v317, %v322
    %v327 = vadd.f32 %v299, %v323
    %v328 = vadd.f32 %v300, %v324
    %v329 = vadd.f32 %v301, %v325
    %v330 = vadd.f32 %v302, %v326
    %vm332 = vcmask 1041408
    %v333 = vrot.slane %v48, 6
    %v334 = vsel %vm332, %v333, %v106
    %v336 = vrot.slane %v51, 6
    %v337 = vsel %vm332, %v336, %v112
    %v340 = vrot.slane %v54, 4
    %v342 = vsel %vm120, %v99, %v103
    %v343 = vsel %vm120, %v334, %v49
    %v344 = vsel %vm120, %v337, %v52
    %v345 = vsel %vm120, %v116, %v340
    %347 = vset.pattern.permute.xlu0 0
    %348 = vperm.xlu0 %347, %v342
    %v349 = vpop.permute.xlu0 %348
    %352 = vset.pattern.permute.xlu0 0
    %353 = vperm.xlu0 %352, %v343
    %v354 = vpop.permute.xlu0 %353
    %357 = vset.pattern.permute.xlu0 0
    %358 = vperm.xlu0 %357, %v344
    %v359 = vpop.permute.xlu0 %358
    %362 = vset.pattern.permute.xlu0 0
    %363 = vperm.xlu0 %362, %v345
    %v364 = vpop.permute.xlu0 %363
    %v366 = vlaneseq
    %v367 = vshrl.u32 %v366, 7
    %v368 = vsub.s32 6, %v367
    %v369 = vrot.slane %v56, %v368
    %v370 = vmul.f32 %v349, %v369
    %v371 = vmul.f32 %v354, %v369
    %v372 = vmul.f32 %v359, %v369
    %v373 = vmul.f32 %v364, %v369
    %v374 = vadd.f32 %v327, %v370
    %v375 = vadd.f32 %v328, %v371
    %v376 = vadd.f32 %v329, %v372
    %v377 = vadd.f32 %v330, %v373
    %378 = vset.pattern.permute.xlu0 1
    %379 = vperm.xlu0 %378, %v342
    %v380 = vpop.permute.xlu0 %379
    %382 = vset.pattern.permute.xlu0 1
    %383 = vperm.xlu0 %382, %v343
    %v384 = vpop.permute.xlu0 %383
    %386 = vset.pattern.permute.xlu0 1
    %387 = vperm.xlu0 %386, %v344
    %v388 = vpop.permute.xlu0 %387
    %390 = vset.pattern.permute.xlu0 1
    %391 = vperm.xlu0 %390, %v345
    %v392 = vpop.permute.xlu0 %391
    %v394 = vlaneseq
    %v395 = vshrl.u32 %v394, 7
    %v396 = vsub.s32 7, %v395
    %v397 = vrot.slane %v56, %v396
    %v398 = vmul.f32 %v380, %v397
    %v399 = vmul.f32 %v384, %v397
    %v400 = vmul.f32 %v388, %v397
    %v401 = vmul.f32 %v392, %v397
    %v402 = vadd.f32 %v374, %v398
    %v403 = vadd.f32 %v375, %v399
    %v404 = vadd.f32 %v376, %v400
    %v405 = vadd.f32 %v377, %v401
    %406 = vset.pattern.permute.xlu0 2
    %407 = vperm.xlu0 %406, %v342
    %v408 = vpop.permute.xlu0 %407
    %410 = vset.pattern.permute.xlu0 2
    %411 = vperm.xlu0 %410, %v343
    %v412 = vpop.permute.xlu0 %411
    %414 = vset.pattern.permute.xlu0 2
    %415 = vperm.xlu0 %414, %v344
    %v416 = vpop.permute.xlu0 %415
    %418 = vset.pattern.permute.xlu0 2
    %419 = vperm.xlu0 %418, %v345
    %v420 = vpop.permute.xlu0 %419
    %v422 = vlaneseq
    %v423 = vshrl.u32 %v422, 7
    %v424 = vsub.s32 0, %v423
    %v425 = vrot.slane %v57, %v424
    %v426 = vmul.f32 %v408, %v425
    %v427 = vmul.f32 %v412, %v425
    %v428 = vmul.f32 %v416, %v425
    %v429 = vmul.f32 %v420, %v425
    %v430 = vadd.f32 %v402, %v426
    %v431 = vadd.f32 %v403, %v427
    %v432 = vadd.f32 %v404, %v428
    %v433 = vadd.f32 %v405, %v429
    %v434 = vrot.slane %v47, 6
    %v435 = vsel %vm332, %v434, %v333
    %v437 = vrot.slane %v49, 2
    %v440 = vrot.slane %v50, 4
    %v442 = vrot.slane %v52, 2
    %v444 = vrot.slane %v53, 4
    %v446 = vrot.slane %v53, 6
    %v447 = vrot.slane %v54, 6
    %v448 = vsel %vm332, %v446, %v447
    %v450 = vsel %vm120, %v435, %v48
    %v451 = vsel %vm120, %v437, %v440
    %v452 = vsel %vm120, %v442, %v444
    %v453 = vsel %vm120, %v448, %v54
    %455 = vset.pattern.permute.xlu0 0
    %456 = vperm.xlu0 %455, %v450
    %v457 = vpop.permute.xlu0 %456
    %460 = vset.pattern.permute.xlu0 0
    %461 = vperm.xlu0 %460, %v451
    %v462 = vpop.permute.xlu0 %461
    %465 = vset.pattern.permute.xlu0 0
    %466 = vperm.xlu0 %465, %v452
    %v467 = vpop.permute.xlu0 %466
    %470 = vset.pattern.permute.xlu0 0
    %471 = vperm.xlu0 %470, %v453
    %v472 = vpop.permute.xlu0 %471
    %v474 = vlaneseq
    %v475 = vshrl.u32 %v474, 7
    %v476 = vsub.s32 1, %v475
    %v477 = vrot.slane %v57, %v476
    %v478 = vmul.f32 %v457, %v477
    %v479 = vmul.f32 %v462, %v477
    %v480 = vmul.f32 %v467, %v477
    %v481 = vmul.f32 %v472, %v477
    %v482 = vadd.f32 %v430, %v478
    %v483 = vadd.f32 %v431, %v479
    %v484 = vadd.f32 %v432, %v480
    %v485 = vadd.f32 %v433, %v481
    %486 = vset.pattern.permute.xlu0 1
    %487 = vperm.xlu0 %486, %v450
    %v488 = vpop.permute.xlu0 %487
    %490 = vset.pattern.permute.xlu0 1
    %491 = vperm.xlu0 %490, %v451
    %v492 = vpop.permute.xlu0 %491
    %494 = vset.pattern.permute.xlu0 1
    %495 = vperm.xlu0 %494, %v452
    %v496 = vpop.permute.xlu0 %495
    %498 = vset.pattern.permute.xlu0 1
    %499 = vperm.xlu0 %498, %v453
    %v500 = vpop.permute.xlu0 %499
    %v502 = vlaneseq
    %v503 = vshrl.u32 %v502, 7
    %v504 = vsub.s32 2, %v503
    %v505 = vrot.slane %v57, %v504
    %v506 = vmul.f32 %v488, %v505
    %v507 = vmul.f32 %v492, %v505
    %v508 = vmul.f32 %v496, %v505
    %v509 = vmul.f32 %v500, %v505
    %v510 = vadd.f32 %v482, %v506
    %v511 = vadd.f32 %v483, %v507
    %v512 = vadd.f32 %v484, %v508
    %v513 = vadd.f32 %v485, %v509
    %514 = vset.pattern.permute.xlu0 2
    %515 = vperm.xlu0 %514, %v450
    %v516 = vpop.permute.xlu0 %515
    %518 = vset.pattern.permute.xlu0 2
    %519 = vperm.xlu0 %518, %v451
    %v520 = vpop.permute.xlu0 %519
    %522 = vset.pattern.permute.xlu0 2
    %523 = vperm.xlu0 %522, %v452
    %v524 = vpop.permute.xlu0 %523
    %526 = vset.pattern.permute.xlu0 2
    %527 = vperm.xlu0 %526, %v453
    %v528 = vpop.permute.xlu0 %527
    %v530 = vlaneseq
    %v531 = vshrl.u32 %v530, 7
    %v532 = vsub.s32 3, %v531
    %v533 = vrot.slane %v57, %v532
    %v534 = vmul.f32 %v516, %v533
    %v535 = vmul.f32 %v520, %v533
    %v536 = vmul.f32 %v524, %v533
    %v537 = vmul.f32 %v528, %v533
    %v538 = vadd.f32 %v510, %v534
    %v539 = vadd.f32 %v511, %v535
    %v540 = vadd.f32 %v512, %v536
    %v541 = vadd.f32 %v513, %v537
    %vm542 = vcmask 1040384
    %v543 = vrot.slane %v47, 7
    %v544 = vrot.slane %v48, 7
    %v545 = vsel %vm542, %v543, %v544
    %vm547 = vcmask 1046528
    %v548 = vrot.slane %v48, 1
    %v549 = vrot.slane %v49, 1
    %v550 = vsel %vm547, %v548, %v549
    %v552 = vrot.slane %v49, 3
    %v554 = vrot.slane %v50, 5
    %v556 = vrot.slane %v52, 3
    %v558 = vrot.slane %v53, 5
    %v560 = vrot.slane %v53, 7
    %v561 = vrot.slane %v54, 7
    %v562 = vsel %vm542, %v560, %v561
    %v565 = vrot.slane %v54, 1
    %v566 = vrot.slane %v55, 1
    %v567 = vsel %vm547, %v565, %v566
    %v569 = vsel %vm120, %v545, %v550
    %v570 = vsel %vm120, %v552, %v554
    %v571 = vsel %vm120, %v556, %v558
    %v572 = vsel %vm120, %v562, %v567
    %574 = vset.pattern.permute.xlu0 0
    %575 = vperm.xlu0 %574, %v569
    %v576 = vpop.permute.xlu0 %575
    %579 = vset.pattern.permute.xlu0 0
    %580 = vperm.xlu0 %579, %v570
    %v581 = vpop.permute.xlu0 %580
    %584 = vset.pattern.permute.xlu0 0
    %585 = vperm.xlu0 %584, %v571
    %v586 = vpop.permute.xlu0 %585
    %589 = vset.pattern.permute.xlu0 0
    %590 = vperm.xlu0 %589, %v572
    %v591 = vpop.permute.xlu0 %590
    %v593 = vlaneseq
    %v594 = vshrl.u32 %v593, 7
    %v595 = vsub.s32 4, %v594
    %v596 = vrot.slane %v57, %v595
    %v597 = vmul.f32 %v576, %v596
    %v598 = vmul.f32 %v581, %v596
    %v599 = vmul.f32 %v586, %v596
    %v600 = vmul.f32 %v591, %v596
    %v601 = vadd.f32 %v538, %v597
    %v602 = vadd.f32 %v539, %v598
    %v603 = vadd.f32 %v540, %v599
    %v604 = vadd.f32 %v541, %v600
    %605 = vset.pattern.permute.xlu0 1
    %606 = vperm.xlu0 %605, %v569
    %v607 = vpop.permute.xlu0 %606
    %609 = vset.pattern.permute.xlu0 1
    %610 = vperm.xlu0 %609, %v570
    %v611 = vpop.permute.xlu0 %610
    %613 = vset.pattern.permute.xlu0 1
    %614 = vperm.xlu0 %613, %v571
    %v615 = vpop.permute.xlu0 %614
    %617 = vset.pattern.permute.xlu0 1
    %618 = vperm.xlu0 %617, %v572
    %v619 = vpop.permute.xlu0 %618
    %v621 = vlaneseq
    %v622 = vshrl.u32 %v621, 7
    %v623 = vsub.s32 5, %v622
    %v624 = vrot.slane %v57, %v623
    %v625 = vmul.f32 %v607, %v624
    %v626 = vmul.f32 %v611, %v624
    %v627 = vmul.f32 %v615, %v624
    %v628 = vmul.f32 %v619, %v624
    %v629 = vadd.f32 %v601, %v625
    %v630 = vadd.f32 %v602, %v626
    %v631 = vadd.f32 %v603, %v627
    %v632 = vadd.f32 %v604, %v628
    %633 = vset.pattern.permute.xlu0 2
    %634 = vperm.xlu0 %633, %v569
    %v635 = vpop.permute.xlu0 %634
    %637 = vset.pattern.permute.xlu0 2
    %638 = vperm.xlu0 %637, %v570
    %v639 = vpop.permute.xlu0 %638
    %641 = vset.pattern.permute.xlu0 2
    %642 = vperm.xlu0 %641, %v571
    %v643 = vpop.permute.xlu0 %642
    %645 = vset.pattern.permute.xlu0 2
    %646 = vperm.xlu0 %645, %v572
    %v647 = vpop.permute.xlu0 %646
    %v649 = vlaneseq
    %v650 = vshrl.u32 %v649, 7
    %v651 = vsub.s32 6, %v650
    %v652 = vrot.slane %v57, %v651
    %v653 = vmul.f32 %v635, %v652
    %v654 = vmul.f32 %v639, %v652
    %v655 = vmul.f32 %v643, %v652
    %v656 = vmul.f32 %v647, %v652
    %v657 = vadd.f32 %v629, %v653
    %v658 = vadd.f32 %v630, %v654
    %v659 = vadd.f32 %v631, %v655
    %v660 = vadd.f32 %v632, %v656
    %v661 = vsel %vm98, %v100, %v437
    %v663 = vrot.slane %v49, 4
    %v665 = vrot.slane %v50, 6
    %v667 = vrot.slane %v52, 4
    %v670 = vrot.slane %v55, 2
    %v671 = vsel %vm98, %v117, %v670
    %v673 = vsel %vm120, %v48, %v661
    %v674 = vsel %vm120, %v663, %v665
    %v675 = vsel %vm120, %v667, %v446
    %v676 = vsel %vm120, %v54, %v671
    %678 = vset.pattern.permute.xlu0 0
    %679 = vperm.xlu0 %678, %v673
    %v680 = vpop.permute.xlu0 %679
    %683 = vset.pattern.permute.xlu0 0
    %684 = vperm.xlu0 %683, %v674
    %v685 = vpop.permute.xlu0 %684
    %688 = vset.pattern.permute.xlu0 0
    %689 = vperm.xlu0 %688, %v675
    %v690 = vpop.permute.xlu0 %689
    %693 = vset.pattern.permute.xlu0 0
    %694 = vperm.xlu0 %693, %v676
    %v695 = vpop.permute.xlu0 %694
    %v697 = vlaneseq
    %v698 = vshrl.u32 %v697, 7
    %v699 = vsub.s32 7, %v698
    %v700 = vrot.slane %v57, %v699
    %v701 = vmul.f32 %v680, %v700
    %v702 = vmul.f32 %v685, %v700
    %v703 = vmul.f32 %v690, %v700
    %v704 = vmul.f32 %v695, %v700
    %v705 = vadd.f32 %v657, %v701
    %v706 = vadd.f32 %v658, %v702
    %v707 = vadd.f32 %v659, %v703
    %v708 = vadd.f32 %v660, %v704
    %709 = vset.pattern.permute.xlu0 1
    %710 = vperm.xlu0 %709, %v673
    %v711 = vpop.permute.xlu0 %710
    %713 = vset.pattern.permute.xlu0 1
    %714 = vperm.xlu0 %713, %v674
    %v715 = vpop.permute.xlu0 %714
    %717 = vset.pattern.permute.xlu0 1
    %718 = vperm.xlu0 %717, %v675
    %v719 = vpop.permute.xlu0 %718
    %721 = vset.pattern.permute.xlu0 1
    %722 = vperm.xlu0 %721, %v676
    %v723 = vpop.permute.xlu0 %722
    %v725 = vlaneseq
    %v726 = vshrl.u32 %v725, 7
    %v727 = vsub.s32 0, %v726
    %v728 = vrot.slane %v58, %v727
    %v729 = vmul.f32 %v711, %v728
    %v730 = vmul.f32 %v715, %v728
    %v731 = vmul.f32 %v719, %v728
    %v732 = vmul.f32 %v723, %v728
    %v733 = vadd.f32 %v705, %v729
    %v734 = vadd.f32 %v706, %v730
    %v735 = vadd.f32 %v707, %v731
    %v736 = vadd.f32 %v708, %v732
    %737 = vset.pattern.permute.xlu0 2
    %738 = vperm.xlu0 %737, %v673
    %v739 = vpop.permute.xlu0 %738
    %741 = vset.pattern.permute.xlu0 2
    %742 = vperm.xlu0 %741, %v674
    %v743 = vpop.permute.xlu0 %742
    %745 = vset.pattern.permute.xlu0 2
    %746 = vperm.xlu0 %745, %v675
    %v747 = vpop.permute.xlu0 %746
    %749 = vset.pattern.permute.xlu0 2
    %750 = vperm.xlu0 %749, %v676
    %v751 = vpop.permute.xlu0 %750
    %v753 = vlaneseq
    %v754 = vshrl.u32 %v753, 7
    %v755 = vsub.s32 1, %v754
    %v756 = vrot.slane %v58, %v755
    %v757 = vmul.f32 %v739, %v756
    %v758 = vmul.f32 %v743, %v756
    %v759 = vmul.f32 %v747, %v756
    %v760 = vmul.f32 %v751, %v756
    %v761 = vadd.f32 %v733, %v757
    %v762 = vadd.f32 %v734, %v758
    %v763 = vadd.f32 %v735, %v759
    %v764 = vadd.f32 %v736, %v760
    %v765 = vrot.slane %v50, 2
    %v766 = vrot.slane %v51, 2
    %v767 = vsel %vm98, %v765, %v766
    %v769 = vrot.slane %v55, 6
    %v771 = vsel %vm120, %v50, %v767
    %v772 = vsel %vm120, %v340, %v769
    %774 = vset.pattern.permute.xlu0 0
    %775 = vperm.xlu0 %774, %v771
    %v776 = vpop.permute.xlu0 %775
    %779 = vset.pattern.permute.xlu0 0
    %780 = vperm.xlu0 %779, %v772
    %v781 = vpop.permute.xlu0 %780
    %v783 = vlaneseq
    %v784 = vshrl.u32 %v783, 7
    %v785 = vsub.s32 2, %v784
    %v786 = vrot.slane %v58, %v785
    %v787 = vmul.f32 %v133, %v786
    %v788 = vmul.f32 %v776, %v786
    %v789 = vmul.f32 %v143, %v786
    %v790 = vmul.f32 %v781, %v786
    %v791 = vadd.f32 %v761, %v787
    %v792 = vadd.f32 %v762, %v788
    %v793 = vadd.f32 %v763, %v789
    %v794 = vadd.f32 %v764, %v790
    %795 = vset.pattern.permute.xlu0 1
    %796 = vperm.xlu0 %795, %v771
    %v797 = vpop.permute.xlu0 %796
    %799 = vset.pattern.permute.xlu0 1
    %800 = vperm.xlu0 %799, %v772
    %v801 = vpop.permute.xlu0 %800
    %v803 = vlaneseq
    %v804 = vshrl.u32 %v803, 7
    %v805 = vsub.s32 3, %v804
    %v806 = vrot.slane %v58, %v805
    %v807 = vmul.f32 %v163, %v806
    %v808 = vmul.f32 %v797, %v806
    %v809 = vmul.f32 %v171, %v806
    %v810 = vmul.f32 %v801, %v806
    %v811 = vadd.f32 %v791, %v807
    %v812 = vadd.f32 %v792, %v808
    %v813 = vadd.f32 %v793, %v809
    %v814 = vadd.f32 %v794, %v810
    %815 = vset.pattern.permute.xlu0 2
    %816 = vperm.xlu0 %815, %v771
    %v817 = vpop.permute.xlu0 %816
    %819 = vset.pattern.permute.xlu0 2
    %820 = vperm.xlu0 %819, %v772
    %v821 = vpop.permute.xlu0 %820
    %v823 = vlaneseq
    %v824 = vshrl.u32 %v823, 7
    %v825 = vsub.s32 4, %v824
    %v826 = vrot.slane %v58, %v825
    %v827 = vmul.f32 %v191, %v826
    %v828 = vmul.f32 %v817, %v826
    %v829 = vmul.f32 %v199, %v826
    %v830 = vmul.f32 %v821, %v826
    %v831 = vadd.f32 %v811, %v827
    %v832 = vadd.f32 %v812, %v828
    %v833 = vadd.f32 %v813, %v829
    %v834 = vadd.f32 %v814, %v830
    %v835 = vrot.slane %v50, 1
    %v837 = vrot.slane %v50, 3
    %v838 = vrot.slane %v51, 3
    %v839 = vsel %vm215, %v837, %v838
    %v841 = vrot.slane %v54, 5
    %v842 = vrot.slane %v55, 5
    %v843 = vsel %vm220, %v841, %v842
    %v845 = vrot.slane %v55, 7
    %v847 = vsel %vm120, %v835, %v839
    %v848 = vsel %vm120, %v843, %v845
    %850 = vset.pattern.permute.xlu0 0
    %851 = vperm.xlu0 %850, %v847
    %v852 = vpop.permute.xlu0 %851
    %855 = vset.pattern.permute.xlu0 0
    %856 = vperm.xlu0 %855, %v848
    %v857 = vpop.permute.xlu0 %856
    %v859 = vlaneseq
    %v860 = vshrl.u32 %v859, 7
    %v861 = vsub.s32 5, %v860
    %v862 = vrot.slane %v58, %v861
    %v863 = vmul.f32 %v251, %v862
    %v864 = vmul.f32 %v852, %v862
    %v865 = vmul.f32 %v261, %v862
    %v866 = vmul.f32 %v857, %v862
    %v867 = vadd.f32 %v831, %v863
    %v868 = vadd.f32 %v832, %v864
    %v869 = vadd.f32 %v833, %v865
    %v870 = vadd.f32 %v834, %v866
    %871 = vset.pattern.permute.xlu0 1
    %872 = vperm.xlu0 %871, %v847
    %v873 = vpop.permute.xlu0 %872
    %875 = vset.pattern.permute.xlu0 1
    %876 = vperm.xlu0 %875, %v848
    %v877 = vpop.permute.xlu0 %876
    %v879 = vlaneseq
    %v880 = vshrl.u32 %v879, 7
    %v881 = vsub.s32 6, %v880
    %v882 = vrot.slane %v58, %v881
    %v883 = vmul.f32 %v281, %v882
    %v884 = vmul.f32 %v873, %v882
    %v885 = vmul.f32 %v289, %v882
    %v886 = vmul.f32 %v877, %v882
    %v887 = vadd.f32 %v867, %v883
    %v888 = vadd.f32 %v868, %v884
    %v889 = vadd.f32 %v869, %v885
    %v890 = vadd.f32 %v870, %v886
    %891 = vset.pattern.permute.xlu0 2
    %892 = vperm.xlu0 %891, %v847
    %v893 = vpop.permute.xlu0 %892
    %895 = vset.pattern.permute.xlu0 2
    %896 = vperm.xlu0 %895, %v848
    %v897 = vpop.permute.xlu0 %896
    %v899 = vlaneseq
    %v900 = vshrl.u32 %v899, 7
    %v901 = vsub.s32 7, %v900
    %v902 = vrot.slane %v58, %v901
    %v903 = vmul.f32 %v309, %v902
    %v904 = vmul.f32 %v893, %v902
    %v905 = vmul.f32 %v317, %v902
    %v906 = vmul.f32 %v897, %v902
    %v907 = vadd.f32 %v887, %v903
    %v908 = vadd.f32 %v888, %v904
    %v909 = vadd.f32 %v889, %v905
    %v910 = vadd.f32 %v890, %v906
    %v912 = vsel %vm332, %v447, %v769
    %v914 = vsel %vm120, %v765, %v109
    %v915 = vsel %vm120, %v912, %v55
    %917 = vset.pattern.permute.xlu0 0
    %918 = vperm.xlu0 %917, %v914
    %v919 = vpop.permute.xlu0 %918
    %922 = vset.pattern.permute.xlu0 0
    %923 = vperm.xlu0 %922, %v915
    %v924 = vpop.permute.xlu0 %923
    %v926 = vlaneseq
    %v927 = vshrl.u32 %v926, 7
    %v928 = vsub.s32 0, %v927
    %v929 = vrot.slane %v59, %v928
    %v930 = vmul.f32 %v354, %v929
    %v931 = vmul.f32 %v919, %v929
    %v932 = vmul.f32 %v364, %v929
    %v933 = vmul.f32 %v924, %v929
    %v934 = vadd.f32 %v907, %v930
    %v935 = vadd.f32 %v908, %v931
    %v936 = vadd.f32 %v909, %v932
    %v937 = vadd.f32 %v910, %v933
    %938 = vset.pattern.permute.xlu0 1
    %939 = vperm.xlu0 %938, %v914
    %v940 = vpop.permute.xlu0 %939
    %942 = vset.pattern.permute.xlu0 1
    %943 = vperm.xlu0 %942, %v915
    %v944 = vpop.permute.xlu0 %943
    %v946 = vlaneseq
    %v947 = vshrl.u32 %v946, 7
    %v948 = vsub.s32 1, %v947
    %v949 = vrot.slane %v59, %v948
    %v950 = vmul.f32 %v384, %v949
    %v951 = vmul.f32 %v940, %v949
    %v952 = vmul.f32 %v392, %v949
    %v953 = vmul.f32 %v944, %v949
    %v954 = vadd.f32 %v934, %v950
    %v955 = vadd.f32 %v935, %v951
    %v956 = vadd.f32 %v936, %v952
    %v957 = vadd.f32 %v937, %v953
    %958 = vset.pattern.permute.xlu0 2
    %959 = vperm.xlu0 %958, %v914
    %v960 = vpop.permute.xlu0 %959
    %962 = vset.pattern.permute.xlu0 2
    %963 = vperm.xlu0 %962, %v915
    %v964 = vpop.permute.xlu0 %963
    %v966 = vlaneseq
    %v967 = vshrl.u32 %v966, 7
    %v968 = vsub.s32 2, %v967
    %v969 = vrot.slane %v59, %v968
    %v970 = vmul.f32 %v412, %v969
    %v971 = vmul.f32 %v960, %v969
    %v972 = vmul.f32 %v420, %v969
    %v973 = vmul.f32 %v964, %v969
    %v974 = vadd.f32 %v954, %v970
    %v975 = vadd.f32 %v955, %v971
    %v976 = vadd.f32 %v956, %v972
    %v977 = vadd.f32 %v957, %v973
    %v978 = vld [vmem:[%s2] sm:$0x1]
    %v980 = vlaneseq
    %v981 = vshrl.u32 %v980, 7
    %v982 = vsub.s32 0, %v981
    %v983 = vrot.slane %v978, %v982
    %v985 = vadd.f32 %v974, %v983
    %v986 = vadd.f32 %v975, %v983
    %v987 = vadd.f32 %v976, %v983
    %v988 = vadd.f32 %v977, %v983
    %v989 = vmax.f32 %v985, 0.0
    %v990 = vmax.f32 %v986, 0.0
    %v991 = vmax.f32 %v987, 0.0
    %v992 = vmax.f32 %v988, 0.0
    %v994 = vrot.slane %v989, 2
    %v997 = vrot.slane %v991, 4
    %v999 = vrot.slane %v991, 6
    %v1001 = vsel %vm332, %v989, %v994
    %v1002 = vsel %vm120, %v1001, %v997
    %v1003 = vsel %vm98, %v1002, %v999
    %v1004 = vrot.slane %v989, 1
    %v1006 = vrot.slane %v989, 3
    %v1008 = vrot.slane %v991, 5
    %v1010 = vrot.slane %v991, 7
    %v1012 = vsel %vm332, %v1004, %v1006
    %v1013 = vsel %vm120, %v1012, %v1008
    %v1014 = vsel %vm98, %v1013, %v1010
    %vm1015 = vcmask 261120
    %v1017 = vsel %vm1015, %v1014, 0
    %1019 = vmatprep.subr.mxu0 0.0
    %1020 = vmatpush1.msra.mxu0 %v64
    %1021 = vmatprep.subr.mxu0 0.0
    %1022 = vmatpush1.msra.mxu0 %v65
    %1023 = vmatprep.subr.mxu0 0.0
    %1024 = vmatpush1.msra.mxu0 %v66
    %1025 = vmatprep.subr.mxu0 0.0
    %1026 = vmatpush1.msra.mxu0 %v67
    %1027 = vmatprep.subr.mxu0 0.0
    %1028 = vmatpush1.msra.mxu0 0.0
    %1029 = vmatprep.subr.mxu0 0.0
    %1030 = vmatpush1.msra.mxu0 0.0
    %1031 = vmatprep.subr.mxu0 0.0
    %1032 = vmatpush1.msra.mxu0 0.0
    %1033 = vmatprep.subr.mxu0 0.0
    %1034 = vmatpush1.msra.mxu0 0.0
    %1035 = vmatprep.subr.mxu0 0.0
    %1036 = vmatpush1.msra.mxu0 0.0
    %1037 = vmatprep.subr.mxu0 0.0
    %1038 = vmatpush1.msra.mxu0 0.0
    %1039 = vmatprep.subr.mxu0 0.0
    %1040 = vmatpush1.msra.mxu0 0.0
    %1041 = vmatprep.subr.mxu0 0.0
    %1042 = vmatpush1.msra.mxu0 0.0
    %1043 = vmatprep.subr.mxu0 0.0
    %1044 = vmatpush1.msra.mxu0 0.0
    %1045 = vmatprep.subr.mxu0 0.0
    %1046 = vmatpush1.msra.mxu0 0.0
    %1047 = vmatprep.subr.mxu0 0.0
    %1048 = vmatpush1.msra.mxu0 0.0
    %1049 = vmatprep.subr.mxu0 0.0
    %1050 = vmatpush1.msra.mxu0 0.0
    %1051 = vmatprep.subr.mxu0 0.0
    %1052 = vmatpush1.msra.mxu0 0.0
    %1053 = vmatprep.subr.mxu0 0.0
    %1054 = vmatpush1.msra.mxu0 0.0
    %1055 = vmatprep.subr.mxu0 0.0
    %1056 = vmatpush1.msra.mxu0 0.0
    %1057 = vmatprep.subr.mxu0 0.0
    %1058 = vmatpush1.msra.mxu0 0.0
    %1059 = vmatprep.subr.mxu0 0.0
    %1060 = vmatpush1.msra.mxu0 0.0
    %1061 = vmatprep.subr.mxu0 0.0
    %1062 = vmatpush1.msra.mxu0 0.0
    %1063 = vmatprep.subr.mxu0 0.0
    %1064 = vmatpush1.msra.mxu0 0.0
    %1065 = vmatprep.subr.mxu0 0.0
    %1066 = vmatpush1.msra.mxu0 0.0
    %1067 = vmatprep.subr.mxu0 0.0
    %1068 = vmatpush1.msra.mxu0 0.0
    %1069 = vmatprep.subr.mxu0 0.0
    %1070 = vmatpush1.msra.mxu0 0.0
    %1071 = vmatprep.subr.mxu0 0.0
    %1072 = vmatpush1.msra.mxu0 0.0
    %1073 = vmatprep.subr.mxu0 0.0
    %1074 = vmatpush1.msra.mxu0 0.0
    %1075 = vmatprep.subr.mxu0 0.0
    %1076 = vmatpush1.msra.mxu0 0.0
    %1077 = vmatprep.subr.mxu0 0.0
    %1078 = vmatpush1.msra.mxu0 0.0
    %1079 = vmatprep.subr.mxu0 0.0
    %1080 = vmatpush1.msra.mxu0 0.0
    %1081 = vmatprep.subr.mxu0 0.0
    %1082 = vmatpush1.msra.mxu0 0.0
    %1083 = vmatprep.mubr.f32.mxu0 0.0
    %1084 = vmatmul.mubr.f32.gmra.mrb[0].mxu0 %v1017
    %v1085 = vpop.f32.mrb[0].mxu0
    %v1086 = vadd.f32 0.0, %v1085
    %v1087 = vpop.f32.mrb[0].mxu0
    %1088 = vdwg.mxu0
    %v1090 = vsel %vm1015, %v1003, 0
    %1092 = vmatprep.subr.mxu0 0.0
    %1093 = vmatpush1.msra.mxu0 %v60
    %1094 = vmatprep.subr.mxu0 0.0
    %1095 = vmatpush1.msra.mxu0 %v61
    %1096 = vmatprep.subr.mxu0 0.0
    %1097 = vmatpush1.msra.mxu0 %v62
    %1098 = vmatprep.subr.mxu0 0.0
    %1099 = vmatpush1.msra.mxu0 %v63
    %1100 = vmatprep.subr.mxu0 0.0
    %1101 = vmatpush1.msra.mxu0 0.0
    %1102 = vmatprep.subr.mxu0 0.0
    %1103 = vmatpush1.msra.mxu0 0.0
    %1104 = vmatprep.subr.mxu0 0.0
    %1105 = vmatpush1.msra.mxu0 0.0
    %1106 = vmatprep.subr.mxu0 0.0
    %1107 = vmatpush1.msra.mxu0 0.0
    %1108 = vmatprep.subr.mxu0 0.0
    %1109 = vmatpush1.msra.mxu0 0.0
    %1110 = vmatprep.subr.mxu0 0.0
    %1111 = vmatpush1.msra.mxu0 0.0
    %1112 = vmatprep.subr.mxu0 0.0
    %1113 = vmatpush1.msra.mxu0 0.0
    %1114 = vmatprep.subr.mxu0 0.0
    %1115 = vmatpush1.msra.mxu0 0.0
    %1116 = vmatprep.subr.mxu0 0.0
    %1117 = vmatpush1.msra.mxu0 0.0
    %1118 = vmatprep.subr.mxu0 0.0
    %1119 = vmatpush1.msra.mxu0 0.0
    %1120 = vmatprep.subr.mxu0 0.0
    %1121 = vmatpush1.msra.mxu0 0.0
    %1122 = vmatprep.subr.mxu0 0.0
    %1123 = vmatpush1.msra.mxu0 0.0
    %1124 = vmatprep.subr.mxu0 0.0
    %1125 = vmatpush1.msra.mxu0 0.0
    %1126 = vmatprep.subr.mxu0 0.0
    %1127 = vmatpush1.msra.mxu0 0.0
    %1128 = vmatprep.subr.mxu0 0.0
    %1129 = vmatpush1.msra.mxu0 0.0
    %1130 = vmatprep.subr.mxu0 0.0
    %1131 = vmatpush1.msra.mxu0 0.0
    %1132 = vmatprep.subr.mxu0 0.0
    %1133 = vmatpush1.msra.mxu0 0.0
    %1134 = vmatprep.subr.mxu0 0.0
    %1135 = vmatpush1.msra.mxu0 0.0
    %1136 = vmatprep.subr.mxu0 0.0
    %1137 = vmatpush1.msra.mxu0 0.0
    %1138 = vmatprep.subr.mxu0 0.0
    %1139 = vmatpush1.msra.mxu0 0.0
    %1140 = vmatprep.subr.mxu0 0.0
    %1141 = vmatpush1.msra.mxu0 0.0
    %1142 = vmatprep.subr.mxu0 0.0
    %1143 = vmatpush1.msra.mxu0 0.0
    %1144 = vmatprep.subr.mxu0 0.0
    %1145 = vmatpush1.msra.mxu0 0.0
    %1146 = vmatprep.subr.mxu0 0.0
    %1147 = vmatpush1.msra.mxu0 0.0
    %1148 = vmatprep.subr.mxu0 0.0
    %1149 = vmatpush1.msra.mxu0 0.0
    %1150 = vmatprep.subr.mxu0 0.0
    %1151 = vmatpush1.msra.mxu0 0.0
    %1152 = vmatprep.subr.mxu0 0.0
    %1153 = vmatpush1.msra.mxu0 0.0
    %1154 = vmatprep.subr.mxu0 0.0
    %1155 = vmatpush1.msra.mxu0 0.0
    %1156 = vmatprep.mubr.f32.mxu0 0.0
    %1157 = vmatmul.mubr.f32.gmra.mrb[0].mxu0 %v1090
    %v1158 = vpop.f32.mrb[0].mxu0
    %v1159 = vadd.f32 %v1086, %v1158
    %v1160 = vpop.f32.mrb[0].mxu0
    %1161 = vdwg.mxu0
    %v1162 = vrot.slane %v989, 4
    %v1164 = vsel %vm332, %v994, %v1162
    %v1165 = vsel %vm120, %v1164, %v999
    %v1166 = vsel %vm98, %v1165, %v991
    %v1168 = vsel %vm1015, %v1166, 0
    %1170 = vmatprep.subr.mxu0 0.0
    %1171 = vmatpush1.msra.mxu0 %v68
    %1172 = vmatprep.subr.mxu0 0.0
    %1173 = vmatpush1.msra.mxu0 %v69
    %1174 = vmatprep.subr.mxu0 0.0
    %1175 = vmatpush1.msra.mxu0 %v70
    %1176 = vmatprep.subr.mxu0 0.0
    %1177 = vmatpush1.msra.mxu0 %v71
    %1178 = vmatprep.subr.mxu0 0.0
    %1179 = vmatpush1.msra.mxu0 0.0
    %1180 = vmatprep.subr.mxu0 0.0
    %1181 = vmatpush1.msra.mxu0 0.0
    %1182 = vmatprep.subr.mxu0 0.0
    %1183 = vmatpush1.msra.mxu0 0.0
    %1184 = vmatprep.subr.mxu0 0.0
    %1185 = vmatpush1.msra.mxu0 0.0
    %1186 = vmatprep.subr.mxu0 0.0
    %1187 = vmatpush1.msra.mxu0 0.0
    %1188 = vmatprep.subr.mxu0 0.0
    %1189 = vmatpush1.msra.mxu0 0.0
    %1190 = vmatprep.subr.mxu0 0.0
    %1191 = vmatpush1.msra.mxu0 0.0
    %1192 = vmatprep.subr.mxu0 0.0
    %1193 = vmatpush1.msra.mxu0 0.0
    %1194 = vmatprep.subr.mxu0 0.0
    %1195 = vmatpush1.msra.mxu0 0.0
    %1196 = vmatprep.subr.mxu0 0.0
    %1197 = vmatpush1.msra.mxu0 0.0
    %1198 = vmatprep.subr.mxu0 0.0
    %1199 = vmatpush1.msra.mxu0 0.0
    %1200 = vmatprep.subr.mxu0 0.0
    %1201 = vmatpush1.msra.mxu0 0.0
    %1202 = vmatprep.subr.mxu0 0.0
    %1203 = vmatpush1.msra.mxu0 0.0
    %1204 = vmatprep.subr.mxu0 0.0
    %1205 = vmatpush1.msra.mxu0 0.0
    %1206 = vmatprep.subr.mxu0 0.0
    %1207 = vmatpush1.msra.mxu0 0.0
    %1208 = vmatprep.subr.mxu0 0.0
    %1209 = vmatpush1.msra.mxu0 0.0
    %1210 = vmatprep.subr.mxu0 0.0
    %1211 = vmatpush1.msra.mxu0 0.0
    %1212 = vmatprep.subr.mxu0 0.0
    %1213 = vmatpush1.msra.mxu0 0.0
    %1214 = vmatprep.subr.mxu0 0.0
    %1215 = vmatpush1.msra.mxu0 0.0
    %1216 = vmatprep.subr.mxu0 0.0
    %1217 = vmatpush1.msra.mxu0 0.0
    %1218 = vmatprep.subr.mxu0 0.0
    %1219 = vmatpush1.msra.mxu0 0.0
    %1220 = vmatprep.subr.mxu0 0.0
    %1221 = vmatpush1.msra.mxu0 0.0
    %1222 = vmatprep.subr.mxu0 0.0
    %1223 = vmatpush1.msra.mxu0 0.0
    %1224 = vmatprep.subr.mxu0 0.0
    %1225 = vmatpush1.msra.mxu0 0.0
    %1226 = vmatprep.subr.mxu0 0.0
    %1227 = vmatpush1.msra.mxu0 0.0
    %1228 = vmatprep.subr.mxu0 0.0
    %1229 = vmatpush1.msra.mxu0 0.0
    %1230 = vmatprep.subr.mxu0 0.0
    %1231 = vmatpush1.msra.mxu0 0.0
    %1232 = vmatprep.subr.mxu0 0.0
    %1233 = vmatpush1.msra.mxu0 0.0
    %1234 = vmatprep.mubr.f32.mxu0 0.0
    %1235 = vmatmul.mubr.f32.gmra.mrb[0].mxu0 %v1168
    %v1236 = vpop.f32.mrb[0].mxu0
    %v1237 = vadd.f32 0.0, %v1236
    %v1238 = vpop.f32.mrb[0].mxu0
    %1239 = vdwg.mxu0
    %v1240 = vadd.f32 %v1159, %v1237
    %v1242 = vrot.slane %v990, 6
    %v1245 = vrot.slane %v992, 2
    %v1247 = vsel %vm332, %v1162, %v1242
    %v1248 = vsel %vm120, %v1247, %v991
    %v1249 = vsel %vm98, %v1248, %v1245
    %v1251 = vsel %vm1015, %v1249, 0
    %1253 = vmatprep.subr.mxu0 0.0
    %1254 = vmatpush1.msra.mxu0 %v72
    %1255 = vmatprep.subr.mxu0 0.0
    %1256 = vmatpush1.msra.mxu0 %v73
    %1257 = vmatprep.subr.mxu0 0.0
    %1258 = vmatpush1.msra.mxu0 %v74
    %1259 = vmatprep.subr.mxu0 0.0
    %1260 = vmatpush1.msra.mxu0 %v75
    %1261 = vmatprep.subr.mxu0 0.0
    %1262 = vmatpush1.msra.mxu0 0.0
    %1263 = vmatprep.subr.mxu0 0.0
    %1264 = vmatpush1.msra.mxu0 0.0
    %1265 = vmatprep.subr.mxu0 0.0
    %1266 = vmatpush1.msra.mxu0 0.0
    %1267 = vmatprep.subr.mxu0 0.0
    %1268 = vmatpush1.msra.mxu0 0.0
    %1269 = vmatprep.subr.mxu0 0.0
    %1270 = vmatpush1.msra.mxu0 0.0
    %1271 = vmatprep.subr.mxu0 0.0
    %1272 = vmatpush1.msra.mxu0 0.0
    %1273 = vmatprep.subr.mxu0 0.0
    %1274 = vmatpush1.msra.mxu0 0.0
    %1275 = vmatprep.subr.mxu0 0.0
    %1276 = vmatpush1.msra.mxu0 0.0
    %1277 = vmatprep.subr.mxu0 0.0
    %1278 = vmatpush1.msra.mxu0 0.0
    %1279 = vmatprep.subr.mxu0 0.0
    %1280 = vmatpush1.msra.mxu0 0.0
    %1281 = vmatprep.subr.mxu0 0.0
    %1282 = vmatpush1.msra.mxu0 0.0
    %1283 = vmatprep.subr.mxu0 0.0
    %1284 = vmatpush1.msra.mxu0 0.0
    %1285 = vmatprep.subr.mxu0 0.0
    %1286 = vmatpush1.msra.mxu0 0.0
    %1287 = vmatprep.subr.mxu0 0.0
    %1288 = vmatpush1.msra.mxu0 0.0
    %1289 = vmatprep.subr.mxu0 0.0
    %1290 = vmatpush1.msra.mxu0 0.0
    %1291 = vmatprep.subr.mxu0 0.0
    %1292 = vmatpush1.msra.mxu0 0.0
    %1293 = vmatprep.subr.mxu0 0.0
    %1294 = vmatpush1.msra.mxu0 0.0
    %1295 = vmatprep.subr.mxu0 0.0
    %1296 = vmatpush1.msra.mxu0 0.0
    %1297 = vmatprep.subr.mxu0 0.0
    %1298 = vmatpush1.msra.mxu0 0.0
    %1299 = vmatprep.subr.mxu0 0.0
    %1300 = vmatpush1.msra.mxu0 0.0
    %1301 = vmatprep.subr.mxu0 0.0
    %1302 = vmatpush1.msra.mxu0 0.0
    %1303 = vmatprep.subr.mxu0 0.0
    %1304 = vmatpush1.msra.mxu0 0.0
    %1305 = vmatprep.subr.mxu0 0.0
    %1306 = vmatpush1.msra.mxu0 0.0
    %1307 = vmatprep.subr.mxu0 0.0
    %1308 = vmatpush1.msra.mxu0 0.0
    %1309 = vmatprep.subr.mxu0 0.0
    %1310 = vmatpush1.msra.mxu0 0.0
    %1311 = vmatprep.subr.mxu0 0.0
    %1312 = vmatpush1.msra.mxu0 0.0
    %1313 = vmatprep.subr.mxu0 0.0
    %1314 = vmatpush1.msra.mxu0 0.0
    %1315 = vmatprep.subr.mxu0 0.0
    %1316 = vmatpush1.msra.mxu0 0.0
    %1317 = vmatprep.mubr.f32.mxu0 0.0
    %1318 = vmatmul.mubr.f32.gmra.mrb[0].mxu0 %v1251
    %v1319 = vpop.f32.mrb[0].mxu0
    %v1320 = vadd.f32 0.0, %v1319
    %v1321 = vpop.f32.mrb[0].mxu0
    %1322 = vdwg.mxu0
    %v1323 = vadd.f32 %v1240, %v1320
    %v1324 = vrot.slane %v989, 5
    %v1326 = vrot.slane %v990, 7
    %v1328 = vrot.slane %v991, 1
    %v1330 = vrot.slane %v992, 3
    %v1332 = vsel %vm332, %v1324, %v1326
    %v1333 = vsel %vm120, %v1332, %v1328
    %v1334 = vsel %vm98, %v1333, %v1330
    %v1336 = vsel %vm1015, %v1334, 0
    %1338 = vmatprep.subr.mxu0 0.0
    %1339 = vmatpush1.msra.mxu0 %v76
    %1340 = vmatprep.subr.mxu0 0.0
    %1341 = vmatpush1.msra.mxu0 %v77
    %1342 = vmatprep.subr.mxu0 0.0
    %1343 = vmatpush1.msra.mxu0 %v78
    %1344 = vmatprep.subr.mxu0 0.0
    %1345 = vmatpush1.msra.mxu0 %v79
    %1346 = vmatprep.subr.mxu0 0.0
    %1347 = vmatpush1.msra.mxu0 0.0
    %1348 = vmatprep.subr.mxu0 0.0
    %1349 = vmatpush1.msra.mxu0 0.0
    %1350 = vmatprep.subr.mxu0 0.0
    %1351 = vmatpush1.msra.mxu0 0.0
    %1352 = vmatprep.subr.mxu0 0.0
    %1353 = vmatpush1.msra.mxu0 0.0
    %1354 = vmatprep.subr.mxu0 0.0
    %1355 = vmatpush1.msra.mxu0 0.0
    %1356 = vmatprep.subr.mxu0 0.0
    %1357 = vmatpush1.msra.mxu0 0.0
    %1358 = vmatprep.subr.mxu0 0.0
    %1359 = vmatpush1.msra.mxu0 0.0
    %1360 = vmatprep.subr.mxu0 0.0
    %1361 = vmatpush1.msra.mxu0 0.0
    %1362 = vmatprep.subr.mxu0 0.0
    %1363 = vmatpush1.msra.mxu0 0.0
    %1364 = vmatprep.subr.mxu0 0.0
    %1365 = vmatpush1.msra.mxu0 0.0
    %1366 = vmatprep.subr.mxu0 0.0
    %1367 = vmatpush1.msra.mxu0 0.0
    %1368 = vmatprep.subr.mxu0 0.0
    %1369 = vmatpush1.msra.mxu0 0.0
    %1370 = vmatprep.subr.mxu0 0.0
    %1371 = vmatpush1.msra.mxu0 0.0
    %1372 = vmatprep.subr.mxu0 0.0
    %1373 = vmatpush1.msra.mxu0 0.0
    %1374 = vmatprep.subr.mxu0 0.0
    %1375 = vmatpush1.msra.mxu0 0.0
    %1376 = vmatprep.subr.mxu0 0.0
    %1377 = vmatpush1.msra.mxu0 0.0
    %1378 = vmatprep.subr.mxu0 0.0
    %1379 = vmatpush1.msra.mxu0 0.0
    %1380 = vmatprep.subr.mxu0 0.0
    %1381 = vmatpush1.msra.mxu0 0.0
    %1382 = vmatprep.subr.mxu0 0.0
    %1383 = vmatpush1.msra.mxu0 0.0
    %1384 = vmatprep.subr.mxu0 0.0
    %1385 = vmatpush1.msra.mxu0 0.0
    %1386 = vmatprep.subr.mxu0 0.0
    %1387 = vmatpush1.msra.mxu0 0.0
    %1388 = vmatprep.subr.mxu0 0.0
    %1389 = vmatpush1.msra.mxu0 0.0
    %1390 = vmatprep.subr.mxu0 0.0
    %1391 = vmatpush1.msra.mxu0 0.0
    %1392 = vmatprep.subr.mxu0 0.0
    %1393 = vmatpush1.msra.mxu0 0.0
    %1394 = vmatprep.subr.mxu0 0.0
    %1395 = vmatpush1.msra.mxu0 0.0
    %1396 = vmatprep.subr.mxu0 0.0
    %1397 = vmatpush1.msra.mxu0 0.0
    %1398 = vmatprep.subr.mxu0 0.0
    %1399 = vmatpush1.msra.mxu0 0.0
    %1400 = vmatprep.subr.mxu0 0.0
    %1401 = vmatpush1.msra.mxu0 0.0
    %1402 = vmatprep.mubr.f32.mxu0 0.0
    %1403 = vmatmul.mubr.f32.gmra.mrb[0].mxu0 %v1336
    %v1404 = vpop.f32.mrb[0].mxu0
    %v1405 = vadd.f32 0.0, %v1404
    %v1406 = vpop.f32.mrb[0].mxu0
    %1407 = vdwg.mxu0
    %v1408 = vadd.f32 %v1323, %v1405
    %v1409 = vrot.slane %v989, 6
    %v1411 = vrot.slane %v991, 2
    %v1413 = vrot.slane %v992, 4
    %v1415 = vsel %vm332, %v1409, %v990
    %v1416 = vsel %vm120, %v1415, %v1411
    %v1417 = vsel %vm98, %v1416, %v1413
    %v1419 = vsel %vm1015, %v1417, 0
    %1421 = vmatprep.subr.mxu0 0.0
    %1422 = vmatpush1.msra.mxu0 %v80
    %1423 = vmatprep.subr.mxu0 0.0
    %1424 = vmatpush1.msra.mxu0 %v81
    %1425 = vmatprep.subr.mxu0 0.0
    %1426 = vmatpush1.msra.mxu0 %v82
    %1427 = vmatprep.subr.mxu0 0.0
    %1428 = vmatpush1.msra.mxu0 %v83
    %1429 = vmatprep.subr.mxu0 0.0
    %1430 = vmatpush1.msra.mxu0 0.0
    %1431 = vmatprep.subr.mxu0 0.0
    %1432 = vmatpush1.msra.mxu0 0.0
    %1433 = vmatprep.subr.mxu0 0.0
    %1434 = vmatpush1.msra.mxu0 0.0
    %1435 = vmatprep.subr.mxu0 0.0
    %1436 = vmatpush1.msra.mxu0 0.0
    %1437 = vmatprep.subr.mxu0 0.0
    %1438 = vmatpush1.msra.mxu0 0.0
    %1439 = vmatprep.subr.mxu0 0.0
    %1440 = vmatpush1.msra.mxu0 0.0
    %1441 = vmatprep.subr.mxu0 0.0
    %1442 = vmatpush1.msra.mxu0 0.0
    %1443 = vmatprep.subr.mxu0 0.0
    %1444 = vmatpush1.msra.mxu0 0.0
    %1445 = vmatprep.subr.mxu0 0.0
    %1446 = vmatpush1.msra.mxu0 0.0
    %1447 = vmatprep.subr.mxu0 0.0
    %1448 = vmatpush1.msra.mxu0 0.0
    %1449 = vmatprep.subr.mxu0 0.0
    %1450 = vmatpush1.msra.mxu0 0.0
    %1451 = vmatprep.subr.mxu0 0.0
    %1452 = vmatpush1.msra.mxu0 0.0
    %1453 = vmatprep.subr.mxu0 0.0
    %1454 = vmatpush1.msra.mxu0 0.0
    %1455 = vmatprep.subr.mxu0 0.0
    %1456 = vmatpush1.msra.mxu0 0.0
    %1457 = vmatprep.subr.mxu0 0.0
    %1458 = vmatpush1.msra.mxu0 0.0
    %1459 = vmatprep.subr.mxu0 0.0
    %1460 = vmatpush1.msra.mxu0 0.0
    %1461 = vmatprep.subr.mxu0 0.0
    %1462 = vmatpush1.msra.mxu0 0.0
    %1463 = vmatprep.subr.mxu0 0.0
    %1464 = vmatpush1.msra.mxu0 0.0
    %1465 = vmatprep.subr.mxu0 0.0
    %1466 = vmatpush1.msra.mxu0 0.0
    %1467 = vmatprep.subr.mxu0 0.0
    %1468 = vmatpush1.msra.mxu0 0.0
    %1469 = vmatprep.subr.mxu0 0.0
    %1470 = vmatpush1.msra.mxu0 0.0
    %1471 = vmatprep.subr.mxu0 0.0
    %1472 = vmatpush1.msra.mxu0 0.0
    %1473 = vmatprep.subr.mxu0 0.0
    %1474 = vmatpush1.msra.mxu0 0.0
    %1475 = vmatprep.subr.mxu0 0.0
    %1476 = vmatpush1.msra.mxu0 0.0
    %1477 = vmatprep.subr.mxu0 0.0
    %1478 = vmatpush1.msra.mxu0 0.0
    %1479 = vmatprep.subr.mxu0 0.0
    %1480 = vmatpush1.msra.mxu0 0.0
    %1481 = vmatprep.subr.mxu0 0.0
    %1482 = vmatpush1.msra.mxu0 0.0
    %1483 = vmatprep.subr.mxu0 0.0
    %1484 = vmatpush1.msra.mxu0 0.0
    %1485 = vmatprep.mubr.f32.mxu0 0.0
    %1486 = vmatmul.mubr.f32.gmra.mrb[0].mxu0 %v1419
    %v1487 = vpop.f32.mrb[0].mxu0
    %v1488 = vadd.f32 0.0, %v1487
    %v1489 = vpop.f32.mrb[0].mxu0
    %1490 = vdwg.mxu0
    %v1491 = vadd.f32 %v1408, %v1488
    %v1492 = vrot.slane %v990, 2
    %v1494 = vrot.slane %v992, 6
    %v1496 = vsel %vm332, %v990, %v1492
    %v1497 = vsel %vm120, %v1496, %v1413
    %v1498 = vsel %vm98, %v1497, %v1494
    %v1500 = vsel %vm1015, %v1498, 0
    %1502 = vmatprep.subr.mxu0 0.0
    %1503 = vmatpush1.msra.mxu0 %v84
    %1504 = vmatprep.subr.mxu0 0.0
    %1505 = vmatpush1.msra.mxu0 %v85
    %1506 = vmatprep.subr.mxu0 0.0
    %1507 = vmatpush1.msra.mxu0 %v86
    %1508 = vmatprep.subr.mxu0 0.0
    %1509 = vmatpush1.msra.mxu0 %v87
    %1510 = vmatprep.subr.mxu0 0.0
    %1511 = vmatpush1.msra.mxu0 0.0
    %1512 = vmatprep.subr.mxu0 0.0
    %1513 = vmatpush1.msra.mxu0 0.0
    %1514 = vmatprep.subr.mxu0 0.0
    %1515 = vmatpush1.msra.mxu0 0.0
    %1516 = vmatprep.subr.mxu0 0.0
    %1517 = vmatpush1.msra.mxu0 0.0
    %1518 = vmatprep.subr.mxu0 0.0
    %1519 = vmatpush1.msra.mxu0 0.0
    %1520 = vmatprep.subr.mxu0 0.0
    %1521 = vmatpush1.msra.mxu0 0.0
    %1522 = vmatprep.subr.mxu0 0.0
    %1523 = vmatpush1.msra.mxu0 0.0
    %1524 = vmatprep.subr.mxu0 0.0
    %1525 = vmatpush1.msra.mxu0 0.0
    %1526 = vmatprep.subr.mxu0 0.0
    %1527 = vmatpush1.msra.mxu0 0.0
    %1528 = vmatprep.subr.mxu0 0.0
    %1529 = vmatpush1.msra.mxu0 0.0
    %1530 = vmatprep.subr.mxu0 0.0
    %1531 = vmatpush1.msra.mxu0 0.0
    %1532 = vmatprep.subr.mxu0 0.0
    %1533 = vmatpush1.msra.mxu0 0.0
    %1534 = vmatprep.subr.mxu0 0.0
    %1535 = vmatpush1.msra.mxu0 0.0
    %1536 = vmatprep.subr.mxu0 0.0
    %1537 = vmatpush1.msra.mxu0 0.0
    %1538 = vmatprep.subr.mxu0 0.0
    %1539 = vmatpush1.msra.mxu0 0.0
    %1540 = vmatprep.subr.mxu0 0.0
    %1541 = vmatpush1.msra.mxu0 0.0
    %1542 = vmatprep.subr.mxu0 0.0
    %1543 = vmatpush1.msra.mxu0 0.0
    %1544 = vmatprep.subr.mxu0 0.0
    %1545 = vmatpush1.msra.mxu0 0.0
    %1546 = vmatprep.subr.mxu0 0.0
    %1547 = vmatpush1.msra.mxu0 0.0
    %1548 = vmatprep.subr.mxu0 0.0
    %1549 = vmatpush1.msra.mxu0 0.0
    %1550 = vmatprep.subr.mxu0 0.0
    %1551 = vmatpush1.msra.mxu0 0.0
    %1552 = vmatprep.subr.mxu0 0.0
    %1553 = vmatpush1.msra.mxu0 0.0
    %1554 = vmatprep.subr.mxu0 0.0
    %1555 = vmatpush1.msra.mxu0 0.0
    %1556 = vmatprep.subr.mxu0 0.0
    %1557 = vmatpush1.msra.mxu0 0.0
    %1558 = vmatprep.subr.mxu0 0.0
    %1559 = vmatpush1.msra.mxu0 0.0
    %1560 = vmatprep.subr.mxu0 0.0
    %1561 = vmatpush1.msra.mxu0 0.0
    %1562 = vmatprep.subr.mxu0 0.0
    %1563 = vmatpush1.msra.mxu0 0.0
    %1564 = vmatprep.subr.mxu0 0.0
    %1565 = vmatpush1.msra.mxu0 0.0
    %1566 = vmatprep.mubr.f32.mxu0 0.0
    %1567 = vmatmul.mubr.f32.gmra.mrb[0].mxu0 %v1500
    %v1568 = vpop.f32.mrb[0].mxu0
    %v1569 = vadd.f32 0.0, %v1568
    %v1570 = vpop.f32.mrb[0].mxu0
    %1571 = vdwg.mxu0
    %v1572 = vadd.f32 %v1491, %v1569
    %v1573 = vrot.slane %v990, 1
    %v1575 = vrot.slane %v990, 3
    %v1577 = vrot.slane %v992, 5
    %v1579 = vrot.slane %v992, 7
    %v1581 = vsel %vm332, %v1573, %v1575
    %v1582 = vsel %vm120, %v1581, %v1577
    %v1583 = vsel %vm98, %v1582, %v1579
    %v1585 = vsel %vm1015, %v1583, 0
    %1587 = vmatprep.subr.mxu0 0.0
    %1588 = vmatpush1.msra.mxu0 %v88
    %1589 = vmatprep.subr.mxu0 0.0
    %1590 = vmatpush1.msra.mxu0 %v89
    %1591 = vmatprep.subr.mxu0 0.0
    %1592 = vmatpush1.msra.mxu0 %v90
    %1593 = vmatprep.subr.mxu0 0.0
    %1594 = vmatpush1.msra.mxu0 %v91
    %1595 = vmatprep.subr.mxu0 0.0
    %1596 = vmatpush1.msra.mxu0 0.0
    %1597 = vmatprep.subr.mxu0 0.0
    %1598 = vmatpush1.msra.mxu0 0.0
    %1599 = vmatprep.subr.mxu0 0.0
    %1600 = vmatpush1.msra.mxu0 0.0
    %1601 = vmatprep.subr.mxu0 0.0
    %1602 = vmatpush1.msra.mxu0 0.0
    %1603 = vmatprep.subr.mxu0 0.0
    %1604 = vmatpush1.msra.mxu0 0.0
    %1605 = vmatprep.subr.mxu0 0.0
    %1606 = vmatpush1.msra.mxu0 0.0
    %1607 = vmatprep.subr.mxu0 0.0
    %1608 = vmatpush1.msra.mxu0 0.0
    %1609 = vmatprep.subr.mxu0 0.0
    %1610 = vmatpush1.msra.mxu0 0.0
    %1611 = vmatprep.subr.mxu0 0.0
    %1612 = vmatpush1.msra.mxu0 0.0
    %1613 = vmatprep.subr.mxu0 0.0
    %1614 = vmatpush1.msra.mxu0 0.0
    %1615 = vmatprep.subr.mxu0 0.0
    %1616 = vmatpush1.msra.mxu0 0.0
    %1617 = vmatprep.subr.mxu0 0.0
    %1618 = vmatpush1.msra.mxu0 0.0
    %1619 = vmatprep.subr.mxu0 0.0
    %1620 = vmatpush1.msra.mxu0 0.0
    %1621 = vmatprep.subr.mxu0 0.0
    %1622 = vmatpush1.msra.mxu0 0.0
    %1623 = vmatprep.subr.mxu0 0.0
    %1624 = vmatpush1.msra.mxu0 0.0
    %1625 = vmatprep.subr.mxu0 0.0
    %1626 = vmatpush1.msra.mxu0 0.0
    %1627 = vmatprep.subr.mxu0 0.0
    %1628 = vmatpush1.msra.mxu0 0.0
    %1629 = vmatprep.subr.mxu0 0.0
    %1630 = vmatpush1.msra.mxu0 0.0
    %1631 = vmatprep.subr.mxu0 0.0
    %1632 = vmatpush1.msra.mxu0 0.0
    %1633 = vmatprep.subr.mxu0 0.0
    %1634 = vmatpush1.msra.mxu0 0.0
    %1635 = vmatprep.subr.mxu0 0.0
    %1636 = vmatpush1.msra.mxu0 0.0
    %1637 = vmatprep.subr.mxu0 0.0
    %1638 = vmatpush1.msra.mxu0 0.0
    %1639 = vmatprep.subr.mxu0 0.0
    %1640 = vmatpush1.msra.mxu0 0.0
    %1641 = vmatprep.subr.mxu0 0.0
    %1642 = vmatpush1.msra.mxu0 0.0
    %1643 = vmatprep.subr.mxu0 0.0
    %1644 = vmatpush1.msra.mxu0 0.0
    %1645 = vmatprep.subr.mxu0 0.0
    %1646 = vmatpush1.msra.mxu0 0.0
    %1647 = vmatprep.subr.mxu0 0.0
    %1648 = vmatpush1.msra.mxu0 0.0
    %1649 = vmatprep.subr.mxu0 0.0
    %1650 = vmatpush1.msra.mxu0 0.0
    %1651 = vmatprep.mubr.f32.mxu0 0.0
    %1652 = vmatmul.mubr.f32.gmra.mrb[0].mxu0 %v1585
    %v1653 = vpop.f32.mrb[0].mxu0
    %v1654 = vadd.f32 0.0, %v1653
    %v1655 = vpop.f32.mrb[0].mxu0
    %1656 = vdwg.mxu0
    %v1657 = vadd.f32 %v1572, %v1654
    %v1658 = vrot.slane %v990, 4
    %v1660 = vsel %vm332, %v1492, %v1658
    %v1661 = vsel %vm120, %v1660, %v1494
    %v1662 = vsel %vm98, %v1661, %v992
    %v1664 = vsel %vm1015, %v1662, 0
    %1666 = vmatprep.subr.mxu0 0.0
    %1667 = vmatpush1.msra.mxu0 %v92
    %1668 = vmatprep.subr.mxu0 0.0
    %1669 = vmatpush1.msra.mxu0 %v93
    %1670 = vmatprep.subr.mxu0 0.0
    %1671 = vmatpush1.msra.mxu0 %v94
    %1672 = vmatprep.subr.mxu0 0.0
    %1673 = vmatpush1.msra.mxu0 %v95
    %1674 = vmatprep.subr.mxu0 0.0
    %1675 = vmatpush1.msra.mxu0 0.0
    %1676 = vmatprep.subr.mxu0 0.0
    %1677 = vmatpush1.msra.mxu0 0.0
    %1678 = vmatprep.subr.mxu0 0.0
    %1679 = vmatpush1.msra.mxu0 0.0
    %1680 = vmatprep.subr.mxu0 0.0
    %1681 = vmatpush1.msra.mxu0 0.0
    %1682 = vmatprep.subr.mxu0 0.0
    %1683 = vmatpush1.msra.mxu0 0.0
    %1684 = vmatprep.subr.mxu0 0.0
    %1685 = vmatpush1.msra.mxu0 0.0
    %1686 = vmatprep.subr.mxu0 0.0
    %1687 = vmatpush1.msra.mxu0 0.0
    %1688 = vmatprep.subr.mxu0 0.0
    %1689 = vmatpush1.msra.mxu0 0.0
    %1690 = vmatprep.subr.mxu0 0.0
    %1691 = vmatpush1.msra.mxu0 0.0
    %1692 = vmatprep.subr.mxu0 0.0
    %1693 = vmatpush1.msra.mxu0 0.0
    %1694 = vmatprep.subr.mxu0 0.0
    %1695 = vmatpush1.msra.mxu0 0.0
    %1696 = vmatprep.subr.mxu0 0.0
    %1697 = vmatpush1.msra.mxu0 0.0
    %1698 = vmatprep.subr.mxu0 0.0
    %1699 = vmatpush1.msra.mxu0 0.0
    %1700 = vmatprep.subr.mxu0 0.0
    %1701 = vmatpush1.msra.mxu0 0.0
    %1702 = vmatprep.subr.mxu0 0.0
    %1703 = vmatpush1.msra.mxu0 0.0
    %1704 = vmatprep.subr.mxu0 0.0
    %1705 = vmatpush1.msra.mxu0 0.0
    %1706 = vmatprep.subr.mxu0 0.0
    %1707 = vmatpush1.msra.mxu0 0.0
    %1708 = vmatprep.subr.mxu0 0.0
    %1709 = vmatpush1.msra.mxu0 0.0
    %1710 = vmatprep.subr.mxu0 0.0
    %1711 = vmatpush1.msra.mxu0 0.0
    %1712 = vmatprep.subr.mxu0 0.0
    %1713 = vmatpush1.msra.mxu0 0.0
    %1714 = vmatprep.subr.mxu0 0.0
    %1715 = vmatpush1.msra.mxu0 0.0
    %1716 = vmatprep.subr.mxu0 0.0
    %1717 = vmatpush1.msra.mxu0 0.0
    %1718 = vmatprep.subr.mxu0 0.0
    %1719 = vmatpush1.msra.mxu0 0.0
    %1720 = vmatprep.subr.mxu0 0.0
    %1721 = vmatpush1.msra.mxu0 0.0
    %1722 = vmatprep.subr.mxu0 0.0
    %1723 = vmatpush1.msra.mxu0 0.0
    %1724 = vmatprep.subr.mxu0 0.0
    %1725 = vmatpush1.msra.mxu0 0.0
    %1726 = vmatprep.subr.mxu0 0.0
    %1727 = vmatpush1.msra.mxu0 0.0
    %1728 = vmatprep.subr.mxu0 0.0
    %1729 = vmatpush1.msra.mxu0 0.0
    %1730 = vmatprep.mubr.f32.mxu0 0.0
    %1731 = vmatmul.mubr.f32.gmra.mrb[0].mxu0 %v1664
    %v1732 = vpop.f32.mrb[0].mxu0
    %v1733 = vadd.f32 0.0, %v1732
    %v1734 = vpop.f32.mrb[0].mxu0
    %1735 = vdwg.mxu0
    %v1736 = vadd.f32 %v1657, %v1733
    %v1737 = vld [vmem:[%s4] sm:$0x1]
    %v1739 = vlaneseq
    %v1740 = vshrl.u32 %v1739, 7
    %v1741 = vsub.s32 0, %v1740
    %v1742 = vrot.slane %v1737, %v1741
    %v1744 = vadd.f32 %v1736, %v1742
    %v1745 = vmax.f32 %v1744, 0.0
    %v1747 = vrot.slane %v1745, 1
    %v1749 = vmax.f32 %v1745, %v1747
    %v1750 = vrot.slane %v1745, 2
    %v1752 = vmax.f32 %v1749, %v1750
    %v1753 = vrot.slane %v1745, 3
    %v1755 = vmax.f32 %v1752, %v1753
    %v1757 = vrot.slane %v1755, 3
    %v1759 = vsel %vm542, %v1755, %v1757
    %v1760 = vld [vmem:[#allocation2] sm:$0xff]
    %v1761 = vld [vmem:[#allocation2 + $0x8] sm:$0xff]
    %v1762 = vld [vmem:[#allocation2 + $0x10] sm:$0xff]
    %v1763 = vld [vmem:[#allocation2 + $0x18] sm:$0xff]
    %v1764 = vld [vmem:[#allocation2 + $0x20] sm:$0xff]
    %v1765 = vld [vmem:[#allocation2 + $0x28] sm:$0xff]
    %v1766 = vld [vmem:[#allocation2 + $0x30] sm:$0xff]
    %v1767 = vld [vmem:[#allocation2 + $0x38] sm:$0xff]
    %v1768 = vld [vmem:[#allocation2 + $0x40] sm:$0xff]
    %v1769 = vld [vmem:[#allocation2 + $0x48] sm:$0xff]
    %v1770 = vld [vmem:[#allocation2 + $0x50] sm:$0xff]
    %v1771 = vld [vmem:[#allocation2 + $0x58] sm:$0xff]
    %v1772 = vld [vmem:[#allocation2 + $0x60] sm:$0xff]
    %v1773 = vld [vmem:[#allocation2 + $0x68] sm:$0xff]
    %v1774 = vld [vmem:[#allocation2 + $0x70] sm:$0xff]
    %v1775 = vld [vmem:[#allocation2 + $0x78] sm:$0xff]
    %v1776 = vld [vmem:[%s6] sm:$0x1]
    %v1778 = vlaneseq
    %v1779 = vshrl.u32 %v1778, 7
    %v1780 = vsub.s32 0, %v1779
    %v1781 = vrot.slane %v1776, %v1780
    %1783 = vmatprep.subr.mxu0 0.0
    %1784 = vmatpush1.msra.mxu0 %v1760
    %1785 = vmatprep.subr.mxu0 0.0
    %1786 = vmatpush1.msra.mxu0 %v1761
    %1787 = vmatprep.subr.mxu0 0.0
    %1788 = vmatpush1.msra.mxu0 %v1762
    %1789 = vmatprep.subr.mxu0 0.0
    %1790 = vmatpush1.msra.mxu0 %v1763
    %1791 = vmatprep.subr.mxu0 0.0
    %1792 = vmatpush1.msra.mxu0 %v1764
    %1793 = vmatprep.subr.mxu0 0.0
    %1794 = vmatpush1.msra.mxu0 %v1765
    %1795 = vmatprep.subr.mxu0 0.0
    %1796 = vmatpush1.msra.mxu0 %v1766
    %1797 = vmatprep.subr.mxu0 0.0
    %1798 = vmatpush1.msra.mxu0 %v1767
    %1799 = vmatprep.subr.mxu0 0.0
    %1800 = vmatpush1.msra.mxu0 %v1768
    %1801 = vmatprep.subr.mxu0 0.0
    %1802 = vmatpush1.msra.mxu0 %v1769
    %1803 = vmatprep.subr.mxu0 0.0
    %1804 = vmatpush1.msra.mxu0 %v1770
    %1805 = vmatprep.subr.mxu0 0.0
    %1806 = vmatpush1.msra.mxu0 %v1771
    %1807 = vmatprep.subr.mxu0 0.0
    %1808 = vmatpush1.msra.mxu0 %v1772
    %1809 = vmatprep.subr.mxu0 0.0
    %1810 = vmatpush1.msra.mxu0 %v1773
    %1811 = vmatprep.subr.mxu0 0.0
    %1812 = vmatpush1.msra.mxu0 %v1774
    %1813 = vmatprep.subr.mxu0 0.0
    %1814 = vmatpush1.msra.mxu0 %v1775
    %1815 = vmatprep.subr.mxu0 0.0
    %1816 = vmatpush1.msra.mxu0 0.0
    %1817 = vmatprep.subr.mxu0 0.0
    %1818 = vmatpush1.msra.mxu0 0.0
    %1819 = vmatprep.subr.mxu0 0.0
    %1820 = vmatpush1.msra.mxu0 0.0
    %1821 = vmatprep.subr.mxu0 0.0
    %1822 = vmatpush1.msra.mxu0 0.0
    %1823 = vmatprep.subr.mxu0 0.0
    %1824 = vmatpush1.msra.mxu0 0.0
    %1825 = vmatprep.subr.mxu0 0.0
    %1826 = vmatpush1.msra.mxu0 0.0
    %1827 = vmatprep.subr.mxu0 0.0
    %1828 = vmatpush1.msra.mxu0 0.0
    %1829 = vmatprep.subr.mxu0 0.0
    %1830 = vmatpush1.msra.mxu0 0.0
    %1831 = vmatprep.subr.mxu0 0.0
    %1832 = vmatpush1.msra.mxu0 0.0
    %1833 = vmatprep.subr.mxu0 0.0
    %1834 = vmatpush1.msra.mxu0 0.0
    %1835 = vmatprep.subr.mxu0 0.0
    %1836 = vmatpush1.msra.mxu0 0.0
    %1837 = vmatprep.subr.mxu0 0.0
    %1838 = vmatpush1.msra.mxu0 0.0
    %1839 = vmatprep.subr.mxu0 0.0
    %1840 = vmatpush1.msra.mxu0 0.0
    %1841 = vmatprep.subr.mxu0 0.0
    %1842 = vmatpush1.msra.mxu0 0.0
    %1843 = vmatprep.subr.mxu0 0.0
    %1844 = vmatpush1.msra.mxu0 0.0
    %1845 = vmatprep.subr.mxu0 0.0
    %1846 = vmatpush1.msra.mxu0 0.0
    %1847 = vmatprep.mubr.f32.mxu0 0.0
    %1848 = vmatmul.mubr.f32.gmra.mrb[0].mxu0 %v1759
    %v1849 = vpop.f32.mrb[0].mxu0
    %v1850 = vadd.f32 %v1781, %v1849
    %v1851 = vpop.f32.mrb[0].mxu0
    %1852 = vdwg.mxu0
    %v1853 = vmax.f32 %v1850, 0.0
    %v1854 = vld [vmem:[%s7] sm:$0xff]
    %v1855 = vld [vmem:[%s7 + $0x8] sm:$0xff]
    %v1856 = vld [vmem:[%s7 + $0x10] sm:$0xff]
    %v1857 = vld [vmem:[%s7 + $0x18] sm:$0xff]
    %v1858 = vld [vmem:[%s7 + $0x20] sm:$0xff]
    %v1859 = vld [vmem:[%s7 + $0x28] sm:$0xff]
    %v1860 = vld [vmem:[%s7 + $0x30] sm:$0xff]
    %v1861 = vld [vmem:[%s7 + $0x38] sm:$0xff]
    %v1862 = vld [vmem:[%s7 + $0x40] sm:$0xff]
    %v1863 = vld [vmem:[%s7 + $0x48] sm:$0xff]
    %v1864 = vld [vmem:[%s7 + $0x50] sm:$0xff]
    %v1865 = vld [vmem:[%s7 + $0x58] sm:$0xff]
    %v1866 = vld [vmem:[%s7 + $0x60] sm:$0xff]
    %v1867 = vld [vmem:[%s7 + $0x68] sm:$0xff]
    %v1868 = vld [vmem:[%s7 + $0x70] sm:$0xff]
    %v1869 = vld [vmem:[%s7 + $0x78] sm:$0xff]
    %v1870 = vld [vmem:[%s8] sm:$0x1]
    %v1872 = vlaneseq
    %v1873 = vshrl.u32 %v1872, 7
    %v1874 = vsub.s32 0, %v1873
    %v1875 = vrot.slane %v1870, %v1874
    %1877 = vmatprep.subr.mxu0 0.0
    %1878 = vmatpush1.msra.mxu0 %v1854
    %1879 = vmatprep.subr.mxu0 0.0
    %1880 = vmatpush1.msra.mxu0 %v1855
    %1881 = vmatprep.subr.mxu0 0.0
    %1882 = vmatpush1.msra.mxu0 %v1856
    %1883 = vmatprep.subr.mxu0 0.0
    %1884 = vmatpush1.msra.mxu0 %v1857
    %1885 = vmatprep.subr.mxu0 0.0
    %1886 = vmatpush1.msra.mxu0 %v1858
    %1887 = vmatprep.subr.mxu0 0.0
    %1888 = vmatpush1.msra.mxu0 %v1859
    %1889 = vmatprep.subr.mxu0 0.0
    %1890 = vmatpush1.msra.mxu0 %v1860
    %1891 = vmatprep.subr.mxu0 0.0
    %1892 = vmatpush1.msra.mxu0 %v1861
    %1893 = vmatprep.subr.mxu0 0.0
    %1894 = vmatpush1.msra.mxu0 %v1862
    %1895 = vmatprep.subr.mxu0 0.0
    %1896 = vmatpush1.msra.mxu0 %v1863
    %1897 = vmatprep.subr.mxu0 0.0
    %1898 = vmatpush1.msra.mxu0 %v1864
    %1899 = vmatprep.subr.mxu0 0.0
    %1900 = vmatpush1.msra.mxu0 %v1865
    %1901 = vmatprep.subr.mxu0 0.0
    %1902 = vmatpush1.msra.mxu0 %v1866
    %1903 = vmatprep.subr.mxu0 0.0
    %1904 = vmatpush1.msra.mxu0 %v1867
    %1905 = vmatprep.subr.mxu0 0.0
    %1906 = vmatpush1.msra.mxu0 %v1868
    %1907 = vmatprep.subr.mxu0 0.0
    %1908 = vmatpush1.msra.mxu0 %v1869
    %1909 = vmatprep.subr.mxu0 0.0
    %1910 = vmatpush1.msra.mxu0 0.0
    %1911 = vmatprep.subr.mxu0 0.0
    %1912 = vmatpush1.msra.mxu0 0.0
    %1913 = vmatprep.subr.mxu0 0.0
    %1914 = vmatpush1.msra.mxu0 0.0
    %1915 = vmatprep.subr.mxu0 0.0
    %1916 = vmatpush1.msra.mxu0 0.0
    %1917 = vmatprep.subr.mxu0 0.0
    %1918 = vmatpush1.msra.mxu0 0.0
    %1919 = vmatprep.subr.mxu0 0.0
    %1920 = vmatpush1.msra.mxu0 0.0
    %1921 = vmatprep.subr.mxu0 0.0
    %1922 = vmatpush1.msra.mxu0 0.0
    %1923 = vmatprep.subr.mxu0 0.0
    %1924 = vmatpush1.msra.mxu0 0.0
    %1925 = vmatprep.subr.mxu0 0.0
    %1926 = vmatpush1.msra.mxu0 0.0
    %1927 = vmatprep.subr.mxu0 0.0
    %1928 = vmatpush1.msra.mxu0 0.0
    %1929 = vmatprep.subr.mxu0 0.0
    %1930 = vmatpush1.msra.mxu0 0.0
    %1931 = vmatprep.subr.mxu0 0.0
    %1932 = vmatpush1.msra.mxu0 0.0
    %1933 = vmatprep.subr.mxu0 0.0
    %1934 = vmatpush1.msra.mxu0 0.0
    %1935 = vmatprep.subr.mxu0 0.0
    %1936 = vmatpush1.msra.mxu0 0.0
    %1937 = vmatprep.subr.mxu0 0.0
    %1938 = vmatpush1.msra.mxu0 0.0
    %1939 = vmatprep.subr.mxu0 0.0
    %1940 = vmatpush1.msra.mxu0 0.0
    %1941 = vmatprep.mubr.f32.mxu0 0.0
    %1942 = vmatmul.mubr.f32.gmra.mrb[0].mxu0 %v1853
    %v1943 = vpop.f32.mrb[0].mxu0
    %v1944 = vadd.f32 %v1875, %v1943
    %v1945 = vpop.f32.mrb[0].mxu0
    %1946 = vdwg.mxu0
    %vm1947 = vcmask 74752
    %v1948 = vsel %vm1947, %v1944, -inf
    %1949 = vmax.xlane.f32.xlu0 %v1948
    %v1950 = vpop.xlane.xlu0 %1949
    %v1951 = vsub.f32 %v1944, %v1950
    %v1952 = vmul.f32 %v1951, 1.442695
    %v1953 = vpow.pop %v1952
    %v1954 = vsel %vm1947, %v1953, 0.0
    %1955 = vadd.xlane.f32.xlu0 %v1954
    %v1956 = vpop.xlane.xlu0 %1955
    %v1957 = vlog2.pop %v1956
    %v1958 = vmul.f32 %v1957, 0.6931472
    %v1959 = vadd.f32 %v1950, %v1958
    %v1960 = vsub.f32 %v1944, %v1959
    %1961 = vst.msk [vmem:[#allocation5] sm:$0x3] %vm1947, %v1960
    // Predicated region
    $region42: #{cnn_forward.1} parent=1 // pred_check
      _
    $region43: #{cnn_forward.1} parent=1 // pred_check_branch
      %1963 = sbr.rel (0) target = $region45
    $region44: #{cnn_forward.1} parent=1 // pred_region
      %s1965 = ssub.s32 32, 32
      %1966 = vsyncadd [#allocation4], %s1965
      %s1968 = sshll.u32 [#allocation5], 4
      %s1969 = int_to_ptr.vmem [resolvable:$true] %s1968
      %1971 = dma.vmem_to_hbm [thread:$0]  %s1969, 32, %s9, [#allocation4]
    $region45: #{cnn_forward.1} parent=1 // pred_fallthru
      _
    // Predicated region
    $region46: #{cnn_forward.1} parent=1 // pred_check
      _
    $region47: #{cnn_forward.1} parent=1 // pred_check_branch
      %1973 = sbr.rel (0) target = $region49
    $region48: #{cnn_forward.1} parent=1 // pred_region
      %1974 = dma.done [#allocation4], 32
    $region49: #{cnn_forward.1} parent=1 // pred_fallthru
      _
    %1975 = vsyncpa [#allocation3], 1
    %1976 = vsyncpa [#allocation4], 1

</llo_original>
